<compile_context>
chip_gen: v6e
topology: v6e:2x2x1
jax: 0.10.0
libtpu: 0.0.40
codegen_flags: <defaults>
</compile_context>

<pallas_src>
import jax
import jax.numpy as jnp
from jax.experimental import pallas as pl
from jax.experimental.pallas import tpu as pltpu

K_RAW = 28 * 28          # 784
K_PAD = 896              # 7 * 128  (lane-aligned K for the big matmul)
TILE_B = 256             # batch tile: multiple of MXU edge, VMEM-cheap everywhere


def encoder_kernel(
    x_ref,               # (TILE_B, K_PAD) bf16
    w1_ref, b1_ref,      # (K_PAD, 128) bf16, (1, 128) f32
    w2_ref, b2_ref,      # (128, 64) f32,     (1, 64)  f32
    w3_ref, b3_ref,      # fused heads: (64, 64) f32, (1, 64) f32
    w4_ref, b4_ref,      # block-diag:  (64, 32) f32, (1, 32) f32
    out_ref,             # (TILE_B, 32) f32 == [mu | sigma]
):
    # shared trunk: bf16 MXU matmul with fp32 accumulation
    h1 = jnp.dot(x_ref[...], w1_ref[...],
                 preferred_element_type=jnp.float32) + b1_ref[...]
    h1 = jnp.maximum(h1, 0.0)
    feat = jnp.dot(h1, w2_ref[...],
                   preferred_element_type=jnp.float32) + b2_ref[...]

    # fused mu/sigma heads: one wide matmul + ReLU, then one block-diag matmul
    h = jnp.maximum(
        jnp.dot(feat, w3_ref[...], preferred_element_type=jnp.float32) + b3_ref[...],
        0.0)
    out_ref[...] = jnp.dot(h, w4_ref[...],
                           preferred_element_type=jnp.float32) + b4_ref[...]


def _pack_params(p):
    """Pad / fuse / cast raw PyTorch-layout params into kernel layout."""
    # big layer: pad K 784 -> 896 with zero rows, cast to bf16
    w1 = jnp.zeros((K_PAD, 128), jnp.float32).at[:K_RAW, :].set(p["w1"])
    w1 = w1.astype(jnp.bfloat16)
    b1 = p["b1"]
    # fuse the two 64->32 head layers into one 64->64
    w3 = jnp.concatenate([p["w3m"], p["w3s"]], axis=1)          # (64, 64)
    b3 = jnp.concatenate([p["b3m"], p["b3s"]], axis=1)          # (1, 64)
    # block-diagonal 64->32 second head layer: [w4m 0; 0 w4s]
    w4 = jnp.zeros((64, 32), jnp.float32)
    w4 = w4.at[:32, :16].set(p["w4m"]).at[32:, 16:].set(p["w4s"])
    b4 = jnp.concatenate([p["b4m"], p["b4s"]], axis=1)          # (1, 32)
    return w1, b1, p["w2"], p["b2"], w3, b3, w4, b4


def encoder_forward(images, params, tile_b=TILE_B):
    """images: (B, 1, 28, 28) float32 (NCHW). Returns (mu, sigma): (B, 16) each."""
    B = images.shape[0]
    x = images.reshape(B, -1).astype(jnp.float32)                 # nn.Flatten
    x = jnp.pad(x, ((0, 0), (0, K_PAD - K_RAW)))                  # K: 784 -> 896

    # pad batch to a multiple of tile_b (padded rows sliced off at the end)
    n_tiles = pl.cdiv(B, tile_b)
    b_pad = n_tiles * tile_b
    if b_pad != B:
        x = jnp.pad(x, ((0, b_pad - B), (0, 0)))
    x = x.astype(jnp.bfloat16)

    w1, b1, w2, b2, w3, b3, w4, b4 = _pack_params(params)

    def const(shape):   # weight/bias: resident in VMEM across all grid steps
        return pl.BlockSpec(shape, lambda i: (0, 0))

    in_specs = [
        pl.BlockSpec((tile_b, K_PAD), lambda i: (i, 0)),          # x tile
        const((K_PAD, 128)), const((1, 128)),
        const((128, 64)),    const((1, 64)),
        const((64, 64)),     const((1, 64)),
        const((64, 32)),     const((1, 32)),
    ]
    out_specs = pl.BlockSpec((tile_b, 32), lambda i: (i, 0))

    flops = 2 * b_pad * (K_PAD * 128 + 128 * 64 + 64 * 64 + 64 * 32)
    bytes_accessed = (
        b_pad * (K_PAD * 2 + 32 * 4)
        + K_PAD * 128 * 2 + 128 * 4
        + 128 * 64 * 4 + 64 * 4
        + 64 * 64 * 4 + 64 * 4
        + 64 * 32 * 4 + 32 * 4
    )

    out = pl.pallas_call(
        encoder_kernel,
        out_shape=jax.ShapeDtypeStruct((b_pad, 32), jnp.float32),
        grid=(n_tiles,),
        in_specs=in_specs,
        out_specs=out_specs,
        compiler_params=pltpu.CompilerParams(
            dimension_semantics=("parallel",)),
        cost_estimate=pl.CostEstimate(
            flops=flops, transcendentals=0, bytes_accessed=bytes_accessed),
    )(x, w1, b1, w2, b2, w3, b3, w4, b4)

    mu = out[:B, :16]
    sigma = out[:B, 16:]
    return mu, sigma


def init_params(key):
    """Deterministic synthetic init (PyTorch-style uniform(-1/sqrt(fan_in), +))."""
    def linear(key, fan_in, fan_out):
        kw, kb = jax.random.split(key)
        bound = 1.0 / jnp.sqrt(fan_in)
        w = jax.random.uniform(kw, (fan_in, fan_out), jnp.float32, -bound, bound)
        b = jax.random.uniform(kb, (1, fan_out), jnp.float32, -bound, bound)
        return w, b

    keys = jax.random.split(key, 6)
    w1, b1 = linear(keys[0], K_RAW, 128)
    w2, b2 = linear(keys[1], 128, 64)
    w3m, b3m = linear(keys[2], 64, 32)
    w4m, b4m = linear(keys[3], 32, 16)
    w3s, b3s = linear(keys[4], 64, 32)
    w4s, b4s = linear(keys[5], 32, 16)
    return dict(
        w1=w1, b1=b1, w2=w2, b2=b2,
        w3m=w3m, b3m=b3m, w4m=w4m, b4m=b4m,
        w3s=w3s, b3s=b3s, w4s=w4s, b4s=b4s,
    )


def reference_forward(images, p):
    """Pure-JAX fp32 reference for correctness check (matches PyTorch module)."""
    B = images.shape[0]
    x = images.reshape(B, -1).astype(jnp.float32)
    h1 = jnp.maximum(x @ p["w1"] + p["b1"], 0.0)
    feat = h1 @ p["w2"] + p["b2"]
    hm = jnp.maximum(feat @ p["w3m"] + p["b3m"], 0.0)
    mu = hm @ p["w4m"] + p["b4m"]
    hs = jnp.maximum(feat @ p["w3s"] + p["b3s"], 0.0)
    sigma = hs @ p["w4s"] + p["b4s"]
    return mu, sigma


if __name__ == "__main__":
    key = jax.random.PRNGKey(0)
    k_img, k_par = jax.random.split(key)

    B = 2
    images = jax.random.normal(k_img, (B, 1, 28, 28), jnp.float32)    # NCHW like PyTorch
    params = init_params(k_par)

    mu, sigma = encoder_forward(images, params)
    mu, sigma = jax.block_until_ready((mu, sigma))

    mu_ref, sigma_ref = reference_forward(images, params)
    assert mu.shape == (B, 16) and sigma.shape == (B, 16)
    # first matmul runs in bf16 (fp32 accumulate) -> slightly looser tolerance
    assert jnp.allclose(mu, mu_ref, atol=2e-2, rtol=2e-2)
    assert jnp.allclose(sigma, sigma_ref, atol=2e-2, rtol=2e-2)

    print("KERNEL_OK")
</pallas_src>

<mosaic_0001>
module attributes {stable_mosaic.version = 11 : i64} {
  func.func @encoder_kernel(%arg0: i32, %arg1: memref<256x896xbf16, #tpu.memory_space<vmem>>, %arg2: memref<896x128xbf16, #tpu.memory_space<vmem>>, %arg3: memref<1x128xf32, #tpu.memory_space<vmem>>, %arg4: memref<128x64xf32, #tpu.memory_space<vmem>>, %arg5: memref<1x64xf32, #tpu.memory_space<vmem>>, %arg6: memref<64x64xf32, #tpu.memory_space<vmem>>, %arg7: memref<1x64xf32, #tpu.memory_space<vmem>>, %arg8: memref<64x32xf32, #tpu.memory_space<vmem>>, %arg9: memref<1x32xf32, #tpu.memory_space<vmem>>, %arg10: memref<256x32xf32, #tpu.memory_space<vmem>>) attributes {dimension_semantics = [#tpu.dimension_semantics<parallel>], iteration_bounds = array<i64: 1>, scalar_prefetch = 0 : i64, scratch_operands = 0 : i64, tpu.core_type = #tpu.core_type<tc>, window_params = [{transform_indices = @transform_0, window_bounds = array<i64: 256, 896>}, {pipeline_mode = #tpu.pipeline_mode<synchronous>, transform_indices = @transform_1, window_bounds = array<i64: 896, 128>}, {pipeline_mode = #tpu.pipeline_mode<synchronous>, transform_indices = @transform_2, window_bounds = array<i64: 1, 128>}, {pipeline_mode = #tpu.pipeline_mode<synchronous>, transform_indices = @transform_3, window_bounds = array<i64: 128, 64>}, {pipeline_mode = #tpu.pipeline_mode<synchronous>, transform_indices = @transform_4, window_bounds = array<i64: 1, 64>}, {pipeline_mode = #tpu.pipeline_mode<synchronous>, transform_indices = @transform_5, window_bounds = array<i64: 64, 64>}, {pipeline_mode = #tpu.pipeline_mode<synchronous>, transform_indices = @transform_6, window_bounds = array<i64: 1, 64>}, {pipeline_mode = #tpu.pipeline_mode<synchronous>, transform_indices = @transform_7, window_bounds = array<i64: 64, 32>}, {pipeline_mode = #tpu.pipeline_mode<synchronous>, transform_indices = @transform_8, window_bounds = array<i64: 1, 32>}, {transform_indices = @transform_9, window_bounds = array<i64: 256, 32>}]} {
    %c0 = arith.constant 0 : index
    %c0_0 = arith.constant 0 : index
    %0 = vector.load %arg1[%c0, %c0_0] : memref<256x896xbf16, #tpu.memory_space<vmem>>, vector<256x896xbf16>
    %c0_1 = arith.constant 0 : index
    %c0_2 = arith.constant 0 : index
    %1 = vector.load %arg2[%c0_1, %c0_2] : memref<896x128xbf16, #tpu.memory_space<vmem>>, vector<896x128xbf16>
    %cst = arith.constant dense<0.000000e+00> : vector<256x128xf32>
    %2 = tpu.matmul %0, %1, %cst {dimension_numbers = #tpu.dot_dimension_numbers<[1], [0], [0], [1], [0, 0, 1, 1], [], []>} : vector<256x896xbf16>, vector<896x128xbf16>, vector<256x128xf32> -> vector<256x128xf32>
    %c0_3 = arith.constant 0 : index
    %c0_4 = arith.constant 0 : index
    %3 = vector.load %arg3[%c0_3, %c0_4] : memref<1x128xf32, #tpu.memory_space<vmem>>, vector<1x128xf32>
    %4 = vector.broadcast %3 : vector<1x128xf32> to vector<256x128xf32>
    %5 = arith.addf %2, %4 : vector<256x128xf32>
    %cst_5 = arith.constant 0.000000e+00 : f32
    %6 = vector.broadcast %cst_5 : f32 to vector<256x128xf32>
    %7 = arith.maximumf %5, %6 : vector<256x128xf32>
    %c0_6 = arith.constant 0 : index
    %c0_7 = arith.constant 0 : index
    %8 = vector.load %arg4[%c0_6, %c0_7] : memref<128x64xf32, #tpu.memory_space<vmem>>, vector<128x64xf32>
    %cst_8 = arith.constant dense<0.000000e+00> : vector<256x64xf32>
    %9 = tpu.matmul %7, %8, %cst_8 {dimension_numbers = #tpu.dot_dimension_numbers<[1], [0], [0], [1], [0, 0, 1, 1], [], []>} : vector<256x128xf32>, vector<128x64xf32>, vector<256x64xf32> -> vector<256x64xf32>
    %c0_9 = arith.constant 0 : index
    %c0_10 = arith.constant 0 : index
    %10 = vector.load %arg5[%c0_9, %c0_10] : memref<1x64xf32, #tpu.memory_space<vmem>>, vector<1x64xf32>
    %11 = vector.broadcast %10 : vector<1x64xf32> to vector<256x64xf32>
    %12 = arith.addf %9, %11 : vector<256x64xf32>
    %c0_11 = arith.constant 0 : index
    %c0_12 = arith.constant 0 : index
    %13 = vector.load %arg6[%c0_11, %c0_12] : memref<64x64xf32, #tpu.memory_space<vmem>>, vector<64x64xf32>
    %cst_13 = arith.constant dense<0.000000e+00> : vector<256x64xf32>
    %14 = tpu.matmul %12, %13, %cst_13 {dimension_numbers = #tpu.dot_dimension_numbers<[1], [0], [0], [1], [0, 0, 1, 1], [], []>} : vector<256x64xf32>, vector<64x64xf32>, vector<256x64xf32> -> vector<256x64xf32>
    %c0_14 = arith.constant 0 : index
    %c0_15 = arith.constant 0 : index
    %15 = vector.load %arg7[%c0_14, %c0_15] : memref<1x64xf32, #tpu.memory_space<vmem>>, vector<1x64xf32>
    %16 = vector.broadcast %15 : vector<1x64xf32> to vector<256x64xf32>
    %17 = arith.addf %14, %16 : vector<256x64xf32>
    %cst_16 = arith.constant 0.000000e+00 : f32
    %18 = vector.broadcast %cst_16 : f32 to vector<256x64xf32>
    %19 = arith.maximumf %17, %18 : vector<256x64xf32>
    %c0_17 = arith.constant 0 : index
    %c0_18 = arith.constant 0 : index
    %20 = vector.load %arg8[%c0_17, %c0_18] : memref<64x32xf32, #tpu.memory_space<vmem>>, vector<64x32xf32>
    %cst_19 = arith.constant dense<0.000000e+00> : vector<256x32xf32>
    %21 = tpu.matmul %19, %20, %cst_19 {dimension_numbers = #tpu.dot_dimension_numbers<[1], [0], [0], [1], [0, 0, 1, 1], [], []>} : vector<256x64xf32>, vector<64x32xf32>, vector<256x32xf32> -> vector<256x32xf32>
    %c0_20 = arith.constant 0 : index
    %c0_21 = arith.constant 0 : index
    %22 = vector.load %arg9[%c0_20, %c0_21] : memref<1x32xf32, #tpu.memory_space<vmem>>, vector<1x32xf32>
    %23 = vector.broadcast %22 : vector<1x32xf32> to vector<256x32xf32>
    %24 = arith.addf %21, %23 : vector<256x32xf32>
    %c0_22 = arith.constant 0 : index
    %c0_23 = arith.constant 0 : index
    %25 = vector.load %arg10[%c0_22, %c0_23] : memref<256x32xf32, #tpu.memory_space<vmem>>, vector<256x32xf32>
    tpu.vector_store %arg10[%c0_22, %c0_23], %24 {strides = array<i32>} : memref<256x32xf32, #tpu.memory_space<vmem>>, vector<256x32xf32>,
    return
  }
  func.func @transform_0(%arg0: i32) -> (i32, i32) {
    %c0_i32 = arith.constant 0 : i32
    %c0_i32_0 = arith.constant 0 : i32
    return %arg0, %c0_i32 : i32, i32
  }
  func.func @transform_1(%arg0: i32) -> (i32, i32) {
    %c0_i32 = arith.constant 0 : i32
    %c0_i32_0 = arith.constant 0 : i32
    %c0_i32_1 = arith.constant 0 : i32
    return %c0_i32, %c0_i32_0 : i32, i32
  }
  func.func @transform_2(%arg0: i32) -> (i32, i32) {
    %c0_i32 = arith.constant 0 : i32
    %c0_i32_0 = arith.constant 0 : i32
    %c0_i32_1 = arith.constant 0 : i32
    return %c0_i32, %c0_i32_0 : i32, i32
  }
  func.func @transform_3(%arg0: i32) -> (i32, i32) {
    %c0_i32 = arith.constant 0 : i32
    %c0_i32_0 = arith.constant 0 : i32
    %c0_i32_1 = arith.constant 0 : i32
    return %c0_i32, %c0_i32_0 : i32, i32
  }
  func.func @transform_4(%arg0: i32) -> (i32, i32) {
    %c0_i32 = arith.constant 0 : i32
    %c0_i32_0 = arith.constant 0 : i32
    %c0_i32_1 = arith.constant 0 : i32
    return %c0_i32, %c0_i32_0 : i32, i32
  }
  func.func @transform_5(%arg0: i32) -> (i32, i32) {
    %c0_i32 = arith.constant 0 : i32
    %c0_i32_0 = arith.constant 0 : i32
    %c0_i32_1 = arith.constant 0 : i32
    return %c0_i32, %c0_i32_0 : i32, i32
  }
  func.func @transform_6(%arg0: i32) -> (i32, i32) {
    %c0_i32 = arith.constant 0 : i32
    %c0_i32_0 = arith.constant 0 : i32
    %c0_i32_1 = arith.constant 0 : i32
    return %c0_i32, %c0_i32_0 : i32, i32
  }
  func.func @transform_7(%arg0: i32) -> (i32, i32) {
    %c0_i32 = arith.constant 0 : i32
    %c0_i32_0 = arith.constant 0 : i32
    %c0_i32_1 = arith.constant 0 : i32
    return %c0_i32, %c0_i32_0 : i32, i32
  }
  func.func @transform_8(%arg0: i32) -> (i32, i32) {
    %c0_i32 = arith.constant 0 : i32
    %c0_i32_0 = arith.constant 0 : i32
    %c0_i32_1 = arith.constant 0 : i32
    return %c0_i32, %c0_i32_0 : i32, i32
  }
  func.func @transform_9(%arg0: i32) -> (i32, i32) {
    %c0_i32 = arith.constant 0 : i32
    %c0_i32_0 = arith.constant 0 : i32
    return %arg0, %c0_i32 : i32, i32
  }
}

</mosaic_0001>

<llo_original>
// kernel: tpu_custom_call.1
$region0: #{tpu_custom_call.1}
  #allocation0 [shape = 'u32[]', space=smem, size = 0x4, offset = 0x4, fixed_abs, tag = 'smem constant byte address 0x4 - core index']
  #allocation1 [shape = 'u32[144,128]{1,0:T(1,128)}', space=vmem, size = 0x12000, scoped, tag = 'internal scratch']
  %s0 = inlined_call_operand.hbm [shape: bf16[256,896], index: 0, kind: input, shape index: {}]
  %s1 = inlined_call_operand.hbm [shape: bf16[896,128], index: 1, kind: input, shape index: {}]
  %s2 = inlined_call_operand.vmem [shape: f32[1,128], index: 2, kind: input, shape index: {}]
  %s3 = inlined_call_operand.vmem [shape: f32[128,64], index: 3, kind: input, shape index: {}]
  %s4 = inlined_call_operand.vmem [shape: f32[1,64], index: 4, kind: input, shape index: {}]
  %s5 = inlined_call_operand.vmem [shape: f32[64,64], index: 5, kind: input, shape index: {}]
  %s6 = inlined_call_operand.vmem [shape: f32[1,64], index: 6, kind: input, shape index: {}]
  %s7 = inlined_call_operand.vmem [shape: f32[64,32], index: 7, kind: input, shape index: {}]
  %s8 = inlined_call_operand.vmem [shape: f32[1,32], index: 8, kind: input, shape index: {}]
  %s9 = inlined_call_operand.vmem [shape: f32[256,32], index: 9, kind: output, shape index: {}]
  %s10 = sld [smem:[#allocation0]]
  $region54: #{tpu_custom_call.1} parent=0
    _
  %s12 = ssub.s32 1, %s10
  %s13 = scalar_select 0, %s12, %s10
  $region1: #{tpu_custom_call.1} parent=0
    #allocation2 [shape = 'u8[458752]{0}', space=vmem, size = 0x70000, scoped, tag = 'input window, operand 0, single buffered']
    #allocation3 [shape = 's32[1]{0}', space=sflag, size = 0x4, scoped, tag = 'scoped memory for tpu_custom_call.1']
    #allocation4 [shape = 'u8[229376]{0}', space=vmem, size = 0x38000, scoped, tag = 'input window, operand 1, single buffered']
    #allocation5 [shape = 's32[1]{0}', space=sflag, size = 0x4, scoped, tag = 'scoped memory for tpu_custom_call.1']
    %14 = vsyncpa [#allocation3], 0
    %15 = vsyncpa [#allocation5], 0
    // Predicated region
    $region2: #{tpu_custom_call.1} parent=1 // pred_check
      _
    $region3: #{tpu_custom_call.1} parent=1 // pred_check_branch
      %17 = sbr.rel (0) target = $region5
    $region4: #{tpu_custom_call.1} parent=1 // pred_region
      %s19 = ssub.s32 14336, 14336
      %20 = vsyncadd [#allocation3], %s19
      %s21 = sshll.u32 [#allocation2], 4
      %s22 = int_to_ptr.vmem [resolvable:$true] %s21
      %27 = dma.hbm_to_vmem [thread:$0]  %s0, 14336, %s22, [#allocation3], 448, 448, 28
    $region5: #{tpu_custom_call.1} parent=1 // pred_fallthru
      _
    // Predicated region
    $region6: #{tpu_custom_call.1} parent=1 // pred_check
      _
    $region7: #{tpu_custom_call.1} parent=1 // pred_check_branch
      %29 = sbr.rel (0) target = $region9
    $region8: #{tpu_custom_call.1} parent=1 // pred_region
      %s31 = ssub.s32 7168, 7168
      %32 = vsyncadd [#allocation5], %s31
      %s33 = sshll.u32 [#allocation4], 4
      %s34 = int_to_ptr.vmem [resolvable:$true] %s33
      %39 = dma.hbm_to_vmem [thread:$0]  %s1, 7168, %s34, [#allocation5], 64, 64, 4
    $region9: #{tpu_custom_call.1} parent=1 // pred_fallthru
      _
    // Predicated region
    $region10: #{tpu_custom_call.1} parent=1 // pred_check
      _
    $region11: #{tpu_custom_call.1} parent=1 // pred_check_branch
      %41 = sbr.rel (0) target = $region13
    $region12: #{tpu_custom_call.1} parent=1 // pred_region
      _
    $region13: #{tpu_custom_call.1} parent=1 // pred_fallthru
      _
    // Predicated region
    $region14: #{tpu_custom_call.1} parent=1 // pred_check
      _
    $region15: #{tpu_custom_call.1} parent=1 // pred_check_branch
      %43 = sbr.rel (0) target = $region17
    $region16: #{tpu_custom_call.1} parent=1 // pred_region
      _
    $region17: #{tpu_custom_call.1} parent=1 // pred_fallthru
      _
    // Predicated region
    $region18: #{tpu_custom_call.1} parent=1 // pred_check
      _
    $region19: #{tpu_custom_call.1} parent=1 // pred_check_branch
      %45 = sbr.rel (0) target = $region21
    $region20: #{tpu_custom_call.1} parent=1 // pred_region
      _
    $region21: #{tpu_custom_call.1} parent=1 // pred_fallthru
      _
    // Predicated region
    $region22: #{tpu_custom_call.1} parent=1 // pred_check
      _
    $region23: #{tpu_custom_call.1} parent=1 // pred_check_branch
      %47 = sbr.rel (0) target = $region25
    $region24: #{tpu_custom_call.1} parent=1 // pred_region
      _
    $region25: #{tpu_custom_call.1} parent=1 // pred_fallthru
      _
    // Predicated region
    $region26: #{tpu_custom_call.1} parent=1 // pred_check
      _
    $region27: #{tpu_custom_call.1} parent=1 // pred_check_branch
      %49 = sbr.rel (0) target = $region29
    $region28: #{tpu_custom_call.1} parent=1 // pred_region
      _
    $region29: #{tpu_custom_call.1} parent=1 // pred_fallthru
      _
    // Predicated region
    $region30: #{tpu_custom_call.1} parent=1 // pred_check
      _
    $region31: #{tpu_custom_call.1} parent=1 // pred_check_branch
      %51 = sbr.rel (0) target = $region33
    $region32: #{tpu_custom_call.1} parent=1 // pred_region
      _
    $region33: #{tpu_custom_call.1} parent=1 // pred_fallthru
      _
    // Predicated region
    $region34: #{tpu_custom_call.1} parent=1 // pred_check
      _
    $region35: #{tpu_custom_call.1} parent=1 // pred_check_branch
      %53 = sbr.rel (0) target = $region37
    $region36: #{tpu_custom_call.1} parent=1 // pred_region
      _
    $region37: #{tpu_custom_call.1} parent=1 // pred_fallthru
      _
    // Predicated region
    $region38: #{tpu_custom_call.1} parent=1 // pred_check
      _
    $region39: #{tpu_custom_call.1} parent=1 // pred_check_branch
      %55 = sbr.rel (0) target = $region41
    $region40: #{tpu_custom_call.1} parent=1 // pred_region
      %56 = dma.done [#allocation3], 14336
    $region41: #{tpu_custom_call.1} parent=1 // pred_fallthru
      _
    // Predicated region
    $region42: #{tpu_custom_call.1} parent=1 // pred_check
      _
    $region43: #{tpu_custom_call.1} parent=1 // pred_check_branch
      %58 = sbr.rel (0) target = $region45
    $region44: #{tpu_custom_call.1} parent=1 // pred_region
      %59 = dma.done [#allocation5], 7168
    $region45: #{tpu_custom_call.1} parent=1 // pred_fallthru
      _
    %v61 = vld [vmem:[#allocation2] sm:$0xff]
    %v62 = vld [vmem:[#allocation2 + $0x8] sm:$0xff]
    %v63 = vld [vmem:[#allocation2 + $0x10] sm:$0xff]
    %v64 = vld [vmem:[#allocation2 + $0x18] sm:$0xf]
    %v65 = vld [vmem:[#allocation2 + $0x1c] sm:$0xff]
    %v66 = vld [vmem:[#allocation2 + $0x24] sm:$0xff]
    %v67 = vld [vmem:[#allocation2 + $0x2c] sm:$0xff]
    %v68 = vld [vmem:[#allocation2 + $0x34] sm:$0xf]
    %v69 = vld [vmem:[#allocation2 + $0x38] sm:$0xff]
    %v70 = vld [vmem:[#allocation2 + $0x40] sm:$0xff]
    %v71 = vld [vmem:[#allocation2 + $0x48] sm:$0xff]
    %v72 = vld [vmem:[#allocation2 + $0x50] sm:$0xf]
    %v73 = vld [vmem:[#allocation2 + $0x54] sm:$0xff]
    %v74 = vld [vmem:[#allocation2 + $0x5c] sm:$0xff]
    %v75 = vld [vmem:[#allocation2 + $0x64] sm:$0xff]
    %v76 = vld [vmem:[#allocation2 + $0x6c] sm:$0xf]
    %v77 = vld [vmem:[#allocation2 + $0x70] sm:$0xff]
    %v78 = vld [vmem:[#allocation2 + $0x78] sm:$0xff]
    %v79 = vld [vmem:[#allocation2 + $0x80] sm:$0xff]
    %v80 = vld [vmem:[#allocation2 + $0x88] sm:$0xf]
    %v81 = vld [vmem:[#allocation2 + $0x8c] sm:$0xff]
    %v82 = vld [vmem:[#allocation2 + $0x94] sm:$0xff]
    %v83 = vld [vmem:[#allocation2 + $0x9c] sm:$0xff]
    %v84 = vld [vmem:[#allocation2 + $0xa4] sm:$0xf]
    %v85 = vld [vmem:[#allocation2 + $0xa8] sm:$0xff]
    %v86 = vld [vmem:[#allocation2 + $0xb0] sm:$0xff]
    %v87 = vld [vmem:[#allocation2 + $0xb8] sm:$0xff]
    %v88 = vld [vmem:[#allocation2 + $0xc0] sm:$0xf]
    %v89 = vld [vmem:[#allocation2 + $0xc4] sm:$0xff]
    %v90 = vld [vmem:[#allocation2 + $0xcc] sm:$0xff]
    %v91 = vld [vmem:[#allocation2 + $0xd4] sm:$0xff]
    %v92 = vld [vmem:[#allocation2 + $0xdc] sm:$0xf]
    %v93 = vld [vmem:[#allocation2 + $0xe0] sm:$0xff]
    %v94 = vld [vmem:[#allocation2 + $0xe8] sm:$0xff]
    %v95 = vld [vmem:[#allocation2 + $0xf0] sm:$0xff]
    %v96 = vld [vmem:[#allocation2 + $0xf8] sm:$0xf]
    %v97 = vld [vmem:[#allocation2 + $0xfc] sm:$0xff]
    %v98 = vld [vmem:[#allocation2 + $0x104] sm:$0xff]
    %v99 = vld [vmem:[#allocation2 + $0x10c] sm:$0xff]
    %v100 = vld [vmem:[#allocation2 + $0x114] sm:$0xf]
    %v101 = vld [vmem:[#allocation2 + $0x118] sm:$0xff]
    %v102 = vld [vmem:[#allocation2 + $0x120] sm:$0xff]
    %v103 = vld [vmem:[#allocation2 + $0x128] sm:$0xff]
    %v104 = vld [vmem:[#allocation2 + $0x130] sm:$0xf]
    %v105 = vld [vmem:[#allocation2 + $0x134] sm:$0xff]
    %v106 = vld [vmem:[#allocation2 + $0x13c] sm:$0xff]
    %v107 = vld [vmem:[#allocation2 + $0x144] sm:$0xff]
    %v108 = vld [vmem:[#allocation2 + $0x14c] sm:$0xf]
    %v109 = vld [vmem:[#allocation2 + $0x150] sm:$0xff]
    %v110 = vld [vmem:[#allocation2 + $0x158] sm:$0xff]
    %v111 = vld [vmem:[#allocation2 + $0x160] sm:$0xff]
    %v112 = vld [vmem:[#allocation2 + $0x168] sm:$0xf]
    %v113 = vld [vmem:[#allocation2 + $0x16c] sm:$0xff]
    %v114 = vld [vmem:[#allocation2 + $0x174] sm:$0xff]
    %v115 = vld [vmem:[#allocation2 + $0x17c] sm:$0xff]
    %v116 = vld [vmem:[#allocation2 + $0x184] sm:$0xf]
    %v117 = vld [vmem:[#allocation2 + $0x188] sm:$0xff]
    %v118 = vld [vmem:[#allocation2 + $0x190] sm:$0xff]
    %v119 = vld [vmem:[#allocation2 + $0x198] sm:$0xff]
    %v120 = vld [vmem:[#allocation2 + $0x1a0] sm:$0xf]
    %v121 = vld [vmem:[#allocation2 + $0x1a4] sm:$0xff]
    %v122 = vld [vmem:[#allocation2 + $0x1ac] sm:$0xff]
    %v123 = vld [vmem:[#allocation2 + $0x1b4] sm:$0xff]
    %v124 = vld [vmem:[#allocation2 + $0x1bc] sm:$0xf]
    %v125 = vld [vmem:[#allocation2 + $0x1c0] sm:$0xff]
    %v126 = vld [vmem:[#allocation2 + $0x1c8] sm:$0xff]
    %v127 = vld [vmem:[#allocation2 + $0x1d0] sm:$0xff]
    %v128 = vld [vmem:[#allocation2 + $0x1d8] sm:$0xf]
    %v129 = vld [vmem:[#allocation2 + $0x1dc] sm:$0xff]
    %v130 = vld [vmem:[#allocation2 + $0x1e4] sm:$0xff]
    %v131 = vld [vmem:[#allocation2 + $0x1ec] sm:$0xff]
    %v132 = vld [vmem:[#allocation2 + $0x1f4] sm:$0xf]
    %v133 = vld [vmem:[#allocation2 + $0x1f8] sm:$0xff]
    %v134 = vld [vmem:[#allocation2 + $0x200] sm:$0xff]
    %v135 = vld [vmem:[#allocation2 + $0x208] sm:$0xff]
    %v136 = vld [vmem:[#allocation2 + $0x210] sm:$0xf]
    %v137 = vld [vmem:[#allocation2 + $0x214] sm:$0xff]
    %v138 = vld [vmem:[#allocation2 + $0x21c] sm:$0xff]
    %v139 = vld [vmem:[#allocation2 + $0x224] sm:$0xff]
    %v140 = vld [vmem:[#allocation2 + $0x22c] sm:$0xf]
    %v141 = vld [vmem:[#allocation2 + $0x230] sm:$0xff]
    %v142 = vld [vmem:[#allocation2 + $0x238] sm:$0xff]
    %v143 = vld [vmem:[#allocation2 + $0x240] sm:$0xff]
    %v144 = vld [vmem:[#allocation2 + $0x248] sm:$0xf]
    %v145 = vld [vmem:[#allocation2 + $0x24c] sm:$0xff]
    %v146 = vld [vmem:[#allocation2 + $0x254] sm:$0xff]
    %v147 = vld [vmem:[#allocation2 + $0x25c] sm:$0xff]
    %v148 = vld [vmem:[#allocation2 + $0x264] sm:$0xf]
    %v149 = vld [vmem:[#allocation2 + $0x268] sm:$0xff]
    %v150 = vld [vmem:[#allocation2 + $0x270] sm:$0xff]
    %v151 = vld [vmem:[#allocation2 + $0x278] sm:$0xff]
    %v152 = vld [vmem:[#allocation2 + $0x280] sm:$0xf]
    %v153 = vld [vmem:[#allocation2 + $0x284] sm:$0xff]
    %v154 = vld [vmem:[#allocation2 + $0x28c] sm:$0xff]
    %v155 = vld [vmem:[#allocation2 + $0x294] sm:$0xff]
    %v156 = vld [vmem:[#allocation2 + $0x29c] sm:$0xf]
    %v157 = vld [vmem:[#allocation2 + $0x2a0] sm:$0xff]
    %v158 = vld [vmem:[#allocation2 + $0x2a8] sm:$0xff]
    %v159 = vld [vmem:[#allocation2 + $0x2b0] sm:$0xff]
    %v160 = vld [vmem:[#allocation2 + $0x2b8] sm:$0xf]
    %v161 = vld [vmem:[#allocation2 + $0x2bc] sm:$0xff]
    %v162 = vld [vmem:[#allocation2 + $0x2c4] sm:$0xff]
    %v163 = vld [vmem:[#allocation2 + $0x2cc] sm:$0xff]
    %v164 = vld [vmem:[#allocation2 + $0x2d4] sm:$0xf]
    %v165 = vld [vmem:[#allocation2 + $0x2d8] sm:$0xff]
    %v166 = vld [vmem:[#allocation2 + $0x2e0] sm:$0xff]
    %v167 = vld [vmem:[#allocation2 + $0x2e8] sm:$0xff]
    %v168 = vld [vmem:[#allocation2 + $0x2f0] sm:$0xf]
    %v169 = vld [vmem:[#allocation2 + $0x2f4] sm:$0xff]
    %v170 = vld [vmem:[#allocation2 + $0x2fc] sm:$0xff]
    %v171 = vld [vmem:[#allocation2 + $0x304] sm:$0xff]
    %v172 = vld [vmem:[#allocation2 + $0x30c] sm:$0xf]
    %v173 = vld [vmem:[#allocation2 + $0x310] sm:$0xff]
    %v174 = vld [vmem:[#allocation2 + $0x318] sm:$0xff]
    %v175 = vld [vmem:[#allocation2 + $0x320] sm:$0xff]
    %v176 = vld [vmem:[#allocation2 + $0x328] sm:$0xf]
    %v177 = vld [vmem:[#allocation2 + $0x32c] sm:$0xff]
    %v178 = vld [vmem:[#allocation2 + $0x334] sm:$0xff]
    %v179 = vld [vmem:[#allocation2 + $0x33c] sm:$0xff]
    %v180 = vld [vmem:[#allocation2 + $0x344] sm:$0xf]
    %v181 = vld [vmem:[#allocation2 + $0x348] sm:$0xff]
    %v182 = vld [vmem:[#allocation2 + $0x350] sm:$0xff]
    %v183 = vld [vmem:[#allocation2 + $0x358] sm:$0xff]
    %v184 = vld [vmem:[#allocation2 + $0x360] sm:$0xf]
    %v185 = vld [vmem:[#allocation2 + $0x364] sm:$0xff]
    %v186 = vld [vmem:[#allocation2 + $0x36c] sm:$0xff]
    %v187 = vld [vmem:[#allocation2 + $0x374] sm:$0xff]
    %v188 = vld [vmem:[#allocation2 + $0x37c] sm:$0xf]
    %v189 = vld [vmem:[#allocation4] sm:$0xf]
    %v190 = vld [vmem:[#allocation4 + $0x4] sm:$0xf]
    %v191 = vld [vmem:[#allocation4 + $0x8] sm:$0xf]
    %v192 = vld [vmem:[#allocation4 + $0xc] sm:$0xf]
    %v193 = vld [vmem:[#allocation4 + $0x10] sm:$0xf]
    %v194 = vld [vmem:[#allocation4 + $0x14] sm:$0xf]
    %v195 = vld [vmem:[#allocation4 + $0x18] sm:$0xf]
    %v196 = vld [vmem:[#allocation4 + $0x1c] sm:$0xf]
    %v197 = vld [vmem:[#allocation4 + $0x20] sm:$0xf]
    %v198 = vld [vmem:[#allocation4 + $0x24] sm:$0xf]
    %v199 = vld [vmem:[#allocation4 + $0x28] sm:$0xf]
    %v200 = vld [vmem:[#allocation4 + $0x2c] sm:$0xf]
    %v201 = vld [vmem:[#allocation4 + $0x30] sm:$0xf]
    %v202 = vld [vmem:[#allocation4 + $0x34] sm:$0xf]
    %v203 = vld [vmem:[#allocation4 + $0x38] sm:$0xf]
    %v204 = vld [vmem:[#allocation4 + $0x3c] sm:$0xf]
    %v205 = vld [vmem:[#allocation4 + $0x40] sm:$0xf]
    %v206 = vld [vmem:[#allocation4 + $0x44] sm:$0xf]
    %v207 = vld [vmem:[#allocation4 + $0x48] sm:$0xf]
    %v208 = vld [vmem:[#allocation4 + $0x4c] sm:$0xf]
    %v209 = vld [vmem:[#allocation4 + $0x50] sm:$0xf]
    %v210 = vld [vmem:[#allocation4 + $0x54] sm:$0xf]
    %v211 = vld [vmem:[#allocation4 + $0x58] sm:$0xf]
    %v212 = vld [vmem:[#allocation4 + $0x5c] sm:$0xf]
    %v213 = vld [vmem:[#allocation4 + $0x60] sm:$0xf]
    %v214 = vld [vmem:[#allocation4 + $0x64] sm:$0xf]
    %v215 = vld [vmem:[#allocation4 + $0x68] sm:$0xf]
    %v216 = vld [vmem:[#allocation4 + $0x6c] sm:$0xf]
    %v217 = vld [vmem:[#allocation4 + $0x70] sm:$0xf]
    %v218 = vld [vmem:[#allocation4 + $0x74] sm:$0xf]
    %v219 = vld [vmem:[#allocation4 + $0x78] sm:$0xf]
    %v220 = vld [vmem:[#allocation4 + $0x7c] sm:$0xf]
    %v221 = vld [vmem:[#allocation4 + $0x80] sm:$0xf]
    %v222 = vld [vmem:[#allocation4 + $0x84] sm:$0xf]
    %v223 = vld [vmem:[#allocation4 + $0x88] sm:$0xf]
    %v224 = vld [vmem:[#allocation4 + $0x8c] sm:$0xf]
    %v225 = vld [vmem:[#allocation4 + $0x90] sm:$0xf]
    %v226 = vld [vmem:[#allocation4 + $0x94] sm:$0xf]
    %v227 = vld [vmem:[#allocation4 + $0x98] sm:$0xf]
    %v228 = vld [vmem:[#allocation4 + $0x9c] sm:$0xf]
    %v229 = vld [vmem:[#allocation4 + $0xa0] sm:$0xf]
    %v230 = vld [vmem:[#allocation4 + $0xa4] sm:$0xf]
    %v231 = vld [vmem:[#allocation4 + $0xa8] sm:$0xf]
    %v232 = vld [vmem:[#allocation4 + $0xac] sm:$0xf]
    %v233 = vld [vmem:[#allocation4 + $0xb0] sm:$0xf]
    %v234 = vld [vmem:[#allocation4 + $0xb4] sm:$0xf]
    %v235 = vld [vmem:[#allocation4 + $0xb8] sm:$0xf]
    %v236 = vld [vmem:[#allocation4 + $0xbc] sm:$0xf]
    %v237 = vld [vmem:[#allocation4 + $0xc0] sm:$0xf]
    %v238 = vld [vmem:[#allocation4 + $0xc4] sm:$0xf]
    %v239 = vld [vmem:[#allocation4 + $0xc8] sm:$0xf]
    %v240 = vld [vmem:[#allocation4 + $0xcc] sm:$0xf]
    %v241 = vld [vmem:[#allocation4 + $0xd0] sm:$0xf]
    %v242 = vld [vmem:[#allocation4 + $0xd4] sm:$0xf]
    %v243 = vld [vmem:[#allocation4 + $0xd8] sm:$0xf]
    %v244 = vld [vmem:[#allocation4 + $0xdc] sm:$0xf]
    %v245 = vld [vmem:[#allocation4 + $0xe0] sm:$0xf]
    %v246 = vld [vmem:[#allocation4 + $0xe4] sm:$0xf]
    %v247 = vld [vmem:[#allocation4 + $0xe8] sm:$0xf]
    %v248 = vld [vmem:[#allocation4 + $0xec] sm:$0xf]
    %v249 = vld [vmem:[#allocation4 + $0xf0] sm:$0xf]
    %v250 = vld [vmem:[#allocation4 + $0xf4] sm:$0xf]
    %v251 = vld [vmem:[#allocation4 + $0xf8] sm:$0xf]
    %v252 = vld [vmem:[#allocation4 + $0xfc] sm:$0xf]
    %v253 = vld [vmem:[#allocation4 + $0x100] sm:$0xf]
    %v254 = vld [vmem:[#allocation4 + $0x104] sm:$0xf]
    %v255 = vld [vmem:[#allocation4 + $0x108] sm:$0xf]
    %v256 = vld [vmem:[#allocation4 + $0x10c] sm:$0xf]
    %v257 = vld [vmem:[#allocation4 + $0x110] sm:$0xf]
    %v258 = vld [vmem:[#allocation4 + $0x114] sm:$0xf]
    %v259 = vld [vmem:[#allocation4 + $0x118] sm:$0xf]
    %v260 = vld [vmem:[#allocation4 + $0x11c] sm:$0xf]
    %v261 = vld [vmem:[#allocation4 + $0x120] sm:$0xf]
    %v262 = vld [vmem:[#allocation4 + $0x124] sm:$0xf]
    %v263 = vld [vmem:[#allocation4 + $0x128] sm:$0xf]
    %v264 = vld [vmem:[#allocation4 + $0x12c] sm:$0xf]
    %v265 = vld [vmem:[#allocation4 + $0x130] sm:$0xf]
    %v266 = vld [vmem:[#allocation4 + $0x134] sm:$0xf]
    %v267 = vld [vmem:[#allocation4 + $0x138] sm:$0xf]
    %v268 = vld [vmem:[#allocation4 + $0x13c] sm:$0xf]
    %v269 = vld [vmem:[#allocation4 + $0x140] sm:$0xf]
    %v270 = vld [vmem:[#allocation4 + $0x144] sm:$0xf]
    %v271 = vld [vmem:[#allocation4 + $0x148] sm:$0xf]
    %v272 = vld [vmem:[#allocation4 + $0x14c] sm:$0xf]
    %v273 = vld [vmem:[#allocation4 + $0x150] sm:$0xf]
    %v274 = vld [vmem:[#allocation4 + $0x154] sm:$0xf]
    %v275 = vld [vmem:[#allocation4 + $0x158] sm:$0xf]
    %v276 = vld [vmem:[#allocation4 + $0x15c] sm:$0xf]
    %v277 = vld [vmem:[#allocation4 + $0x160] sm:$0xf]
    %v278 = vld [vmem:[#allocation4 + $0x164] sm:$0xf]
    %v279 = vld [vmem:[#allocation4 + $0x168] sm:$0xf]
    %v280 = vld [vmem:[#allocation4 + $0x16c] sm:$0xf]
    %v281 = vld [vmem:[#allocation4 + $0x170] sm:$0xf]
    %v282 = vld [vmem:[#allocation4 + $0x174] sm:$0xf]
    %v283 = vld [vmem:[#allocation4 + $0x178] sm:$0xf]
    %v284 = vld [vmem:[#allocation4 + $0x17c] sm:$0xf]
    %v285 = vld [vmem:[#allocation4 + $0x180] sm:$0xf]
    %v286 = vld [vmem:[#allocation4 + $0x184] sm:$0xf]
    %v287 = vld [vmem:[#allocation4 + $0x188] sm:$0xf]
    %v288 = vld [vmem:[#allocation4 + $0x18c] sm:$0xf]
    %v289 = vld [vmem:[#allocation4 + $0x190] sm:$0xf]
    %v290 = vld [vmem:[#allocation4 + $0x194] sm:$0xf]
    %v291 = vld [vmem:[#allocation4 + $0x198] sm:$0xf]
    %v292 = vld [vmem:[#allocation4 + $0x19c] sm:$0xf]
    %v293 = vld [vmem:[#allocation4 + $0x1a0] sm:$0xf]
    %v294 = vld [vmem:[#allocation4 + $0x1a4] sm:$0xf]
    %v295 = vld [vmem:[#allocation4 + $0x1a8] sm:$0xf]
    %v296 = vld [vmem:[#allocation4 + $0x1ac] sm:$0xf]
    %v297 = vld [vmem:[#allocation4 + $0x1b0] sm:$0xf]
    %v298 = vld [vmem:[#allocation4 + $0x1b4] sm:$0xf]
    %v299 = vld [vmem:[#allocation4 + $0x1b8] sm:$0xf]
    %v300 = vld [vmem:[#allocation4 + $0x1bc] sm:$0xf]
    %v301 = vld [vmem:[%s2] sm:$0x1]
    %v303 = vlaneseq
    %v304 = vshrl.u32 %v303, 7
    %v305 = vsub.s32 0, %v304
    %v306 = vrot.slane %v301, %v305
    %v436 = vunpack.c.l.b16 %v61
    %v437 = vunpack.c.h.b16 %v61
    %v438 = vunpack.c.l.b16 %v62
    %v439 = vunpack.c.h.b16 %v62
    %v440 = vunpack.c.l.b16 %v63
    %v441 = vunpack.c.h.b16 %v63
    %v442 = vunpack.c.l.b16 %v64
    %v443 = vunpack.c.l.b16 %v65
    %v444 = vunpack.c.h.b16 %v65
    %v445 = vunpack.c.l.b16 %v66
    %v446 = vunpack.c.h.b16 %v66
    %v447 = vunpack.c.l.b16 %v67
    %v448 = vunpack.c.h.b16 %v67
    %v449 = vunpack.c.l.b16 %v68
    %v450 = vunpack.c.l.b16 %v69
    %v451 = vunpack.c.h.b16 %v69
    %v452 = vunpack.c.l.b16 %v70
    %v453 = vunpack.c.h.b16 %v70
    %v454 = vunpack.c.l.b16 %v71
    %v455 = vunpack.c.h.b16 %v71
    %v456 = vunpack.c.l.b16 %v72
    %v457 = vunpack.c.l.b16 %v73
    %v458 = vunpack.c.h.b16 %v73
    %v459 = vunpack.c.l.b16 %v74
    %v460 = vunpack.c.h.b16 %v74
    %v461 = vunpack.c.l.b16 %v75
    %v462 = vunpack.c.h.b16 %v75
    %v463 = vunpack.c.l.b16 %v76
    %v464 = vunpack.c.l.b16 %v77
    %v465 = vunpack.c.h.b16 %v77
    %v466 = vunpack.c.l.b16 %v78
    %v467 = vunpack.c.h.b16 %v78
    %v468 = vunpack.c.l.b16 %v79
    %v469 = vunpack.c.h.b16 %v79
    %v470 = vunpack.c.l.b16 %v80
    %v471 = vunpack.c.l.b16 %v81
    %v472 = vunpack.c.h.b16 %v81
    %v473 = vunpack.c.l.b16 %v82
    %v474 = vunpack.c.h.b16 %v82
    %v475 = vunpack.c.l.b16 %v83
    %v476 = vunpack.c.h.b16 %v83
    %v477 = vunpack.c.l.b16 %v84
    %v478 = vunpack.c.l.b16 %v85
    %v479 = vunpack.c.h.b16 %v85
    %v480 = vunpack.c.l.b16 %v86
    %v481 = vunpack.c.h.b16 %v86
    %v482 = vunpack.c.l.b16 %v87
    %v483 = vunpack.c.h.b16 %v87
    %v484 = vunpack.c.l.b16 %v88
    %v485 = vunpack.c.l.b16 %v89
    %v486 = vunpack.c.h.b16 %v89
    %v487 = vunpack.c.l.b16 %v90
    %v488 = vunpack.c.h.b16 %v90
    %v489 = vunpack.c.l.b16 %v91
    %v490 = vunpack.c.h.b16 %v91
    %v491 = vunpack.c.l.b16 %v92
    %v492 = vunpack.c.l.b16 %v93
    %v493 = vunpack.c.h.b16 %v93
    %v494 = vunpack.c.l.b16 %v94
    %v495 = vunpack.c.h.b16 %v94
    %v496 = vunpack.c.l.b16 %v95
    %v497 = vunpack.c.h.b16 %v95
    %v498 = vunpack.c.l.b16 %v96
    %v499 = vunpack.c.l.b16 %v97
    %v500 = vunpack.c.h.b16 %v97
    %v501 = vunpack.c.l.b16 %v98
    %v502 = vunpack.c.h.b16 %v98
    %v503 = vunpack.c.l.b16 %v99
    %v504 = vunpack.c.h.b16 %v99
    %v505 = vunpack.c.l.b16 %v100
    %v506 = vunpack.c.l.b16 %v101
    %v507 = vunpack.c.h.b16 %v101
    %v508 = vunpack.c.l.b16 %v102
    %v509 = vunpack.c.h.b16 %v102
    %v510 = vunpack.c.l.b16 %v103
    %v511 = vunpack.c.h.b16 %v103
    %v512 = vunpack.c.l.b16 %v104
    %v513 = vunpack.c.l.b16 %v105
    %v514 = vunpack.c.h.b16 %v105
    %v515 = vunpack.c.l.b16 %v106
    %v516 = vunpack.c.h.b16 %v106
    %v517 = vunpack.c.l.b16 %v107
    %v518 = vunpack.c.h.b16 %v107
    %v519 = vunpack.c.l.b16 %v108
    %v520 = vunpack.c.l.b16 %v109
    %v521 = vunpack.c.h.b16 %v109
    %v522 = vunpack.c.l.b16 %v110
    %v523 = vunpack.c.h.b16 %v110
    %v524 = vunpack.c.l.b16 %v111
    %v525 = vunpack.c.h.b16 %v111
    %v526 = vunpack.c.l.b16 %v112
    %v527 = vunpack.c.l.b16 %v113
    %v528 = vunpack.c.h.b16 %v113
    %v529 = vunpack.c.l.b16 %v114
    %v530 = vunpack.c.h.b16 %v114
    %v531 = vunpack.c.l.b16 %v115
    %v532 = vunpack.c.h.b16 %v115
    %v533 = vunpack.c.l.b16 %v116
    %v534 = vunpack.c.l.b16 %v117
    %v535 = vunpack.c.h.b16 %v117
    %v536 = vunpack.c.l.b16 %v118
    %v537 = vunpack.c.h.b16 %v118
    %v538 = vunpack.c.l.b16 %v119
    %v539 = vunpack.c.h.b16 %v119
    %v540 = vunpack.c.l.b16 %v120
    %v541 = vunpack.c.l.b16 %v121
    %v542 = vunpack.c.h.b16 %v121
    %v543 = vunpack.c.l.b16 %v122
    %v544 = vunpack.c.h.b16 %v122
    %v545 = vunpack.c.l.b16 %v123
    %v546 = vunpack.c.h.b16 %v123
    %v547 = vunpack.c.l.b16 %v124
    %v548 = vunpack.c.l.b16 %v125
    %v549 = vunpack.c.h.b16 %v125
    %v550 = vunpack.c.l.b16 %v126
    %v551 = vunpack.c.h.b16 %v126
    %v552 = vunpack.c.l.b16 %v127
    %v553 = vunpack.c.h.b16 %v127
    %v554 = vunpack.c.l.b16 %v128
    %v555 = vunpack.c.l.b16 %v129
    %v556 = vunpack.c.h.b16 %v129
    %v557 = vunpack.c.l.b16 %v130
    %v558 = vunpack.c.h.b16 %v130
    %v559 = vunpack.c.l.b16 %v131
    %v560 = vunpack.c.h.b16 %v131
    %v561 = vunpack.c.l.b16 %v132
    %v562 = vunpack.c.l.b16 %v133
    %v563 = vunpack.c.h.b16 %v133
    %v564 = vunpack.c.l.b16 %v134
    %v565 = vunpack.c.h.b16 %v134
    %v566 = vunpack.c.l.b16 %v135
    %v567 = vunpack.c.h.b16 %v135
    %v568 = vunpack.c.l.b16 %v136
    %v569 = vunpack.c.l.b16 %v137
    %v570 = vunpack.c.h.b16 %v137
    %v571 = vunpack.c.l.b16 %v138
    %v572 = vunpack.c.h.b16 %v138
    %v573 = vunpack.c.l.b16 %v139
    %v574 = vunpack.c.h.b16 %v139
    %v575 = vunpack.c.l.b16 %v140
    %v576 = vunpack.c.l.b16 %v141
    %v577 = vunpack.c.h.b16 %v141
    %v578 = vunpack.c.l.b16 %v142
    %v579 = vunpack.c.h.b16 %v142
    %v580 = vunpack.c.l.b16 %v143
    %v581 = vunpack.c.h.b16 %v143
    %v582 = vunpack.c.l.b16 %v144
    %v583 = vunpack.c.l.b16 %v145
    %v584 = vunpack.c.h.b16 %v145
    %v585 = vunpack.c.l.b16 %v146
    %v586 = vunpack.c.h.b16 %v146
    %v587 = vunpack.c.l.b16 %v147
    %v588 = vunpack.c.h.b16 %v147
    %v589 = vunpack.c.l.b16 %v148
    %v590 = vunpack.c.l.b16 %v149
    %v591 = vunpack.c.h.b16 %v149
    %v592 = vunpack.c.l.b16 %v150
    %v593 = vunpack.c.h.b16 %v150
    %v594 = vunpack.c.l.b16 %v151
    %v595 = vunpack.c.h.b16 %v151
    %v596 = vunpack.c.l.b16 %v152
    %v597 = vunpack.c.l.b16 %v153
    %v598 = vunpack.c.h.b16 %v153
    %v599 = vunpack.c.l.b16 %v154
    %v600 = vunpack.c.h.b16 %v154
    %v601 = vunpack.c.l.b16 %v155
    %v602 = vunpack.c.h.b16 %v155
    %v603 = vunpack.c.l.b16 %v156
    %v604 = vunpack.c.l.b16 %v157
    %v605 = vunpack.c.h.b16 %v157
    %v606 = vunpack.c.l.b16 %v158
    %v607 = vunpack.c.h.b16 %v158
    %v608 = vunpack.c.l.b16 %v159
    %v609 = vunpack.c.h.b16 %v159
    %v610 = vunpack.c.l.b16 %v160
    %v611 = vunpack.c.l.b16 %v161
    %v612 = vunpack.c.h.b16 %v161
    %v613 = vunpack.c.l.b16 %v162
    %v614 = vunpack.c.h.b16 %v162
    %v615 = vunpack.c.l.b16 %v163
    %v616 = vunpack.c.h.b16 %v163
    %v617 = vunpack.c.l.b16 %v164
    %v618 = vunpack.c.l.b16 %v165
    %v619 = vunpack.c.h.b16 %v165
    %v620 = vunpack.c.l.b16 %v166
    %v621 = vunpack.c.h.b16 %v166
    %v622 = vunpack.c.l.b16 %v167
    %v623 = vunpack.c.h.b16 %v167
    %v624 = vunpack.c.l.b16 %v168
    %v625 = vunpack.c.l.b16 %v169
    %v626 = vunpack.c.h.b16 %v169
    %v627 = vunpack.c.l.b16 %v170
    %v628 = vunpack.c.h.b16 %v170
    %v629 = vunpack.c.l.b16 %v171
    %v630 = vunpack.c.h.b16 %v171
    %v631 = vunpack.c.l.b16 %v172
    %v632 = vunpack.c.l.b16 %v173
    %v633 = vunpack.c.h.b16 %v173
    %v634 = vunpack.c.l.b16 %v174
    %v635 = vunpack.c.h.b16 %v174
    %v636 = vunpack.c.l.b16 %v175
    %v637 = vunpack.c.h.b16 %v175
    %v638 = vunpack.c.l.b16 %v176
    %v639 = vunpack.c.l.b16 %v177
    %v640 = vunpack.c.h.b16 %v177
    %v641 = vunpack.c.l.b16 %v178
    %v642 = vunpack.c.h.b16 %v178
    %v643 = vunpack.c.l.b16 %v179
    %v644 = vunpack.c.h.b16 %v179
    %v645 = vunpack.c.l.b16 %v180
    %v646 = vunpack.c.l.b16 %v181
    %v647 = vunpack.c.h.b16 %v181
    %v648 = vunpack.c.l.b16 %v182
    %v649 = vunpack.c.h.b16 %v182
    %v650 = vunpack.c.l.b16 %v183
    %v651 = vunpack.c.h.b16 %v183
    %v652 = vunpack.c.l.b16 %v184
    %v653 = vunpack.c.l.b16 %v185
    %v654 = vunpack.c.h.b16 %v185
    %v655 = vunpack.c.l.b16 %v186
    %v656 = vunpack.c.h.b16 %v186
    %v657 = vunpack.c.l.b16 %v187
    %v658 = vunpack.c.h.b16 %v187
    %v659 = vunpack.c.l.b16 %v188
    %v660 = vpack.c.b16 %v443, %v436
    %v661 = vpack.c.b16 %v444, %v437
    %v662 = vpack.c.b16 %v445, %v438
    %v663 = vpack.c.b16 %v446, %v439
    %v664 = vpack.c.b16 %v447, %v440
    %v665 = vpack.c.b16 %v448, %v441
    %v666 = vpack.c.b16 %v449, %v442
    %v667 = vpack.c.b16 %v457, %v450
    %v668 = vpack.c.b16 %v458, %v451
    %v669 = vpack.c.b16 %v459, %v452
    %v670 = vpack.c.b16 %v460, %v453
    %v671 = vpack.c.b16 %v461, %v454
    %v672 = vpack.c.b16 %v462, %v455
    %v673 = vpack.c.b16 %v463, %v456
    %v674 = vpack.c.b16 %v471, %v464
    %v675 = vpack.c.b16 %v472, %v465
    %v676 = vpack.c.b16 %v473, %v466
    %v677 = vpack.c.b16 %v474, %v467
    %v678 = vpack.c.b16 %v475, %v468
    %v679 = vpack.c.b16 %v476, %v469
    %v680 = vpack.c.b16 %v477, %v470
    %v681 = vpack.c.b16 %v485, %v478
    %v682 = vpack.c.b16 %v486, %v479
    %v683 = vpack.c.b16 %v487, %v480
    %v684 = vpack.c.b16 %v488, %v481
    %v685 = vpack.c.b16 %v489, %v482
    %v686 = vpack.c.b16 %v490, %v483
    %v687 = vpack.c.b16 %v491, %v484
    %v688 = vpack.c.b16 %v499, %v492
    %v689 = vpack.c.b16 %v500, %v493
    %v690 = vpack.c.b16 %v501, %v494
    %v691 = vpack.c.b16 %v502, %v495
    %v692 = vpack.c.b16 %v503, %v496
    %v693 = vpack.c.b16 %v504, %v497
    %v694 = vpack.c.b16 %v505, %v498
    %v695 = vpack.c.b16 %v513, %v506
    %v696 = vpack.c.b16 %v514, %v507
    %v697 = vpack.c.b16 %v515, %v508
    %v698 = vpack.c.b16 %v516, %v509
    %v699 = vpack.c.b16 %v517, %v510
    %v700 = vpack.c.b16 %v518, %v511
    %v701 = vpack.c.b16 %v519, %v512
    %v702 = vpack.c.b16 %v527, %v520
    %v703 = vpack.c.b16 %v528, %v521
    %v704 = vpack.c.b16 %v529, %v522
    %v705 = vpack.c.b16 %v530, %v523
    %v706 = vpack.c.b16 %v531, %v524
    %v707 = vpack.c.b16 %v532, %v525
    %v708 = vpack.c.b16 %v533, %v526
    %v709 = vpack.c.b16 %v541, %v534
    %v710 = vpack.c.b16 %v542, %v535
    %v711 = vpack.c.b16 %v543, %v536
    %v712 = vpack.c.b16 %v544, %v537
    %v713 = vpack.c.b16 %v545, %v538
    %v714 = vpack.c.b16 %v546, %v539
    %v715 = vpack.c.b16 %v547, %v540
    %v716 = vpack.c.b16 %v555, %v548
    %v717 = vpack.c.b16 %v556, %v549
    %v718 = vpack.c.b16 %v557, %v550
    %v719 = vpack.c.b16 %v558, %v551
    %v720 = vpack.c.b16 %v559, %v552
    %v721 = vpack.c.b16 %v560, %v553
    %v722 = vpack.c.b16 %v561, %v554
    %v723 = vpack.c.b16 %v569, %v562
    %v724 = vpack.c.b16 %v570, %v563
    %v725 = vpack.c.b16 %v571, %v564
    %v726 = vpack.c.b16 %v572, %v565
    %v727 = vpack.c.b16 %v573, %v566
    %v728 = vpack.c.b16 %v574, %v567
    %v729 = vpack.c.b16 %v575, %v568
    %v730 = vpack.c.b16 %v583, %v576
    %v731 = vpack.c.b16 %v584, %v577
    %v732 = vpack.c.b16 %v585, %v578
    %v733 = vpack.c.b16 %v586, %v579
    %v734 = vpack.c.b16 %v587, %v580
    %v735 = vpack.c.b16 %v588, %v581
    %v736 = vpack.c.b16 %v589, %v582
    %v737 = vpack.c.b16 %v597, %v590
    %v738 = vpack.c.b16 %v598, %v591
    %v739 = vpack.c.b16 %v599, %v592
    %v740 = vpack.c.b16 %v600, %v593
    %v741 = vpack.c.b16 %v601, %v594
    %v742 = vpack.c.b16 %v602, %v595
    %v743 = vpack.c.b16 %v603, %v596
    %v744 = vpack.c.b16 %v611, %v604
    %v745 = vpack.c.b16 %v612, %v605
    %v746 = vpack.c.b16 %v613, %v606
    %v747 = vpack.c.b16 %v614, %v607
    %v748 = vpack.c.b16 %v615, %v608
    %v749 = vpack.c.b16 %v616, %v609
    %v750 = vpack.c.b16 %v617, %v610
    %v751 = vpack.c.b16 %v625, %v618
    %v752 = vpack.c.b16 %v626, %v619
    %v753 = vpack.c.b16 %v627, %v620
    %v754 = vpack.c.b16 %v628, %v621
    %v755 = vpack.c.b16 %v629, %v622
    %v756 = vpack.c.b16 %v630, %v623
    %v757 = vpack.c.b16 %v631, %v624
    %v758 = vpack.c.b16 %v639, %v632
    %v759 = vpack.c.b16 %v640, %v633
    %v760 = vpack.c.b16 %v641, %v634
    %v761 = vpack.c.b16 %v642, %v635
    %v762 = vpack.c.b16 %v643, %v636
    %v763 = vpack.c.b16 %v644, %v637
    %v764 = vpack.c.b16 %v645, %v638
    %v765 = vpack.c.b16 %v653, %v646
    %v766 = vpack.c.b16 %v654, %v647
    %v767 = vpack.c.b16 %v655, %v648
    %v768 = vpack.c.b16 %v656, %v649
    %v769 = vpack.c.b16 %v657, %v650
    %v770 = vpack.c.b16 %v658, %v651
    %v771 = vpack.c.b16 %v659, %v652
    %v996 = vunpack.c.l.b16 %v189
    %v997 = vunpack.c.l.b16 %v190
    %v998 = vunpack.c.l.b16 %v191
    %v999 = vunpack.c.l.b16 %v192
    %v1000 = vunpack.c.l.b16 %v193
    %v1001 = vunpack.c.l.b16 %v194
    %v1002 = vunpack.c.l.b16 %v195
    %v1003 = vunpack.c.l.b16 %v196
    %v1004 = vunpack.c.l.b16 %v197
    %v1005 = vunpack.c.l.b16 %v198
    %v1006 = vunpack.c.l.b16 %v199
    %v1007 = vunpack.c.l.b16 %v200
    %v1008 = vunpack.c.l.b16 %v201
    %v1009 = vunpack.c.l.b16 %v202
    %v1010 = vunpack.c.l.b16 %v203
    %v1011 = vunpack.c.l.b16 %v204
    %v1012 = vunpack.c.l.b16 %v205
    %v1013 = vunpack.c.l.b16 %v206
    %v1014 = vunpack.c.l.b16 %v207
    %v1015 = vunpack.c.l.b16 %v208
    %v1016 = vunpack.c.l.b16 %v209
    %v1017 = vunpack.c.l.b16 %v210
    %v1018 = vunpack.c.l.b16 %v211
    %v1019 = vunpack.c.l.b16 %v212
    %v1020 = vunpack.c.l.b16 %v213
    %v1021 = vunpack.c.l.b16 %v214
    %v1022 = vunpack.c.l.b16 %v215
    %v1023 = vunpack.c.l.b16 %v216
    %v1024 = vunpack.c.l.b16 %v217
    %v1025 = vunpack.c.l.b16 %v218
    %v1026 = vunpack.c.l.b16 %v219
    %v1027 = vunpack.c.l.b16 %v220
    %v1028 = vunpack.c.l.b16 %v221
    %v1029 = vunpack.c.l.b16 %v222
    %v1030 = vunpack.c.l.b16 %v223
    %v1031 = vunpack.c.l.b16 %v224
    %v1032 = vunpack.c.l.b16 %v225
    %v1033 = vunpack.c.l.b16 %v226
    %v1034 = vunpack.c.l.b16 %v227
    %v1035 = vunpack.c.l.b16 %v228
    %v1036 = vunpack.c.l.b16 %v229
    %v1037 = vunpack.c.l.b16 %v230
    %v1038 = vunpack.c.l.b16 %v231
    %v1039 = vunpack.c.l.b16 %v232
    %v1040 = vunpack.c.l.b16 %v233
    %v1041 = vunpack.c.l.b16 %v234
    %v1042 = vunpack.c.l.b16 %v235
    %v1043 = vunpack.c.l.b16 %v236
    %v1044 = vunpack.c.l.b16 %v237
    %v1045 = vunpack.c.l.b16 %v238
    %v1046 = vunpack.c.l.b16 %v239
    %v1047 = vunpack.c.l.b16 %v240
    %v1048 = vunpack.c.l.b16 %v241
    %v1049 = vunpack.c.l.b16 %v242
    %v1050 = vunpack.c.l.b16 %v243
    %v1051 = vunpack.c.l.b16 %v244
    %v1052 = vunpack.c.l.b16 %v245
    %v1053 = vunpack.c.l.b16 %v246
    %v1054 = vunpack.c.l.b16 %v247
    %v1055 = vunpack.c.l.b16 %v248
    %v1056 = vunpack.c.l.b16 %v249
    %v1057 = vunpack.c.l.b16 %v250
    %v1058 = vunpack.c.l.b16 %v251
    %v1059 = vunpack.c.l.b16 %v252
    %v1060 = vunpack.c.l.b16 %v253
    %v1061 = vunpack.c.l.b16 %v254
    %v1062 = vunpack.c.l.b16 %v255
    %v1063 = vunpack.c.l.b16 %v256
    %v1064 = vunpack.c.l.b16 %v257
    %v1065 = vunpack.c.l.b16 %v258
    %v1066 = vunpack.c.l.b16 %v259
    %v1067 = vunpack.c.l.b16 %v260
    %v1068 = vunpack.c.l.b16 %v261
    %v1069 = vunpack.c.l.b16 %v262
    %v1070 = vunpack.c.l.b16 %v263
    %v1071 = vunpack.c.l.b16 %v264
    %v1072 = vunpack.c.l.b16 %v265
    %v1073 = vunpack.c.l.b16 %v266
    %v1074 = vunpack.c.l.b16 %v267
    %v1075 = vunpack.c.l.b16 %v268
    %v1076 = vunpack.c.l.b16 %v269
    %v1077 = vunpack.c.l.b16 %v270
    %v1078 = vunpack.c.l.b16 %v271
    %v1079 = vunpack.c.l.b16 %v272
    %v1080 = vunpack.c.l.b16 %v273
    %v1081 = vunpack.c.l.b16 %v274
    %v1082 = vunpack.c.l.b16 %v275
    %v1083 = vunpack.c.l.b16 %v276
    %v1084 = vunpack.c.l.b16 %v277
    %v1085 = vunpack.c.l.b16 %v278
    %v1086 = vunpack.c.l.b16 %v279
    %v1087 = vunpack.c.l.b16 %v280
    %v1088 = vunpack.c.l.b16 %v281
    %v1089 = vunpack.c.l.b16 %v282
    %v1090 = vunpack.c.l.b16 %v283
    %v1091 = vunpack.c.l.b16 %v284
    %v1092 = vunpack.c.l.b16 %v285
    %v1093 = vunpack.c.l.b16 %v286
    %v1094 = vunpack.c.l.b16 %v287
    %v1095 = vunpack.c.l.b16 %v288
    %v1096 = vunpack.c.l.b16 %v289
    %v1097 = vunpack.c.l.b16 %v290
    %v1098 = vunpack.c.l.b16 %v291
    %v1099 = vunpack.c.l.b16 %v292
    %v1100 = vunpack.c.l.b16 %v293
    %v1101 = vunpack.c.l.b16 %v294
    %v1102 = vunpack.c.l.b16 %v295
    %v1103 = vunpack.c.l.b16 %v296
    %v1104 = vunpack.c.l.b16 %v297
    %v1105 = vunpack.c.l.b16 %v298
    %v1106 = vunpack.c.l.b16 %v299
    %v1107 = vunpack.c.l.b16 %v300
    %v1108 = vpack.c.b16 %v997, %v996
    %v1109 = vpack.c.b16 %v999, %v998
    %v1110 = vpack.c.b16 %v1001, %v1000
    %v1111 = vpack.c.b16 %v1003, %v1002
    %v1112 = vpack.c.b16 %v1005, %v1004
    %v1113 = vpack.c.b16 %v1007, %v1006
    %v1114 = vpack.c.b16 %v1009, %v1008
    %v1115 = vpack.c.b16 %v1011, %v1010
    %v1116 = vpack.c.b16 %v1013, %v1012
    %v1117 = vpack.c.b16 %v1015, %v1014
    %v1118 = vpack.c.b16 %v1017, %v1016
    %v1119 = vpack.c.b16 %v1019, %v1018
    %v1120 = vpack.c.b16 %v1021, %v1020
    %v1121 = vpack.c.b16 %v1023, %v1022
    %v1122 = vpack.c.b16 %v1025, %v1024
    %v1123 = vpack.c.b16 %v1027, %v1026
    %v1124 = vpack.c.b16 %v1029, %v1028
    %v1125 = vpack.c.b16 %v1031, %v1030
    %v1126 = vpack.c.b16 %v1033, %v1032
    %v1127 = vpack.c.b16 %v1035, %v1034
    %v1128 = vpack.c.b16 %v1037, %v1036
    %v1129 = vpack.c.b16 %v1039, %v1038
    %v1130 = vpack.c.b16 %v1041, %v1040
    %v1131 = vpack.c.b16 %v1043, %v1042
    %v1132 = vpack.c.b16 %v1045, %v1044
    %v1133 = vpack.c.b16 %v1047, %v1046
    %v1134 = vpack.c.b16 %v1049, %v1048
    %v1135 = vpack.c.b16 %v1051, %v1050
    %v1136 = vpack.c.b16 %v1053, %v1052
    %v1137 = vpack.c.b16 %v1055, %v1054
    %v1138 = vpack.c.b16 %v1057, %v1056
    %v1139 = vpack.c.b16 %v1059, %v1058
    %v1140 = vpack.c.b16 %v1061, %v1060
    %v1141 = vpack.c.b16 %v1063, %v1062
    %v1142 = vpack.c.b16 %v1065, %v1064
    %v1143 = vpack.c.b16 %v1067, %v1066
    %v1144 = vpack.c.b16 %v1069, %v1068
    %v1145 = vpack.c.b16 %v1071, %v1070
    %v1146 = vpack.c.b16 %v1073, %v1072
    %v1147 = vpack.c.b16 %v1075, %v1074
    %v1148 = vpack.c.b16 %v1077, %v1076
    %v1149 = vpack.c.b16 %v1079, %v1078
    %v1150 = vpack.c.b16 %v1081, %v1080
    %v1151 = vpack.c.b16 %v1083, %v1082
    %v1152 = vpack.c.b16 %v1085, %v1084
    %v1153 = vpack.c.b16 %v1087, %v1086
    %v1154 = vpack.c.b16 %v1089, %v1088
    %v1155 = vpack.c.b16 %v1091, %v1090
    %v1156 = vpack.c.b16 %v1093, %v1092
    %v1157 = vpack.c.b16 %v1095, %v1094
    %v1158 = vpack.c.b16 %v1097, %v1096
    %v1159 = vpack.c.b16 %v1099, %v1098
    %v1160 = vpack.c.b16 %v1101, %v1100
    %v1161 = vpack.c.b16 %v1103, %v1102
    %v1162 = vpack.c.b16 %v1105, %v1104
    %v1163 = vpack.c.b16 %v1107, %v1106
    %1220 = vmatprep.subr.bf16.mxu0 0
    %1221 = vmatpush1.bf16.msra.mxu0 %v1115
    %1222 = vmatprep.subr.bf16.mxu0 0
    %1223 = vmatpush1.bf16.msra.mxu0 %v1114
    %1224 = vmatprep.subr.bf16.mxu0 0
    %1225 = vmatpush1.bf16.msra.mxu0 %v1113
    %1226 = vmatprep.subr.bf16.mxu0 0
    %1227 = vmatpush1.bf16.msra.mxu0 %v1112
    %1228 = vmatprep.subr.bf16.mxu0 0
    %1229 = vmatpush1.bf16.msra.mxu0 %v1111
    %1230 = vmatprep.subr.bf16.mxu0 0
    %1231 = vmatpush1.bf16.msra.mxu0 %v1110
    %1232 = vmatprep.subr.bf16.mxu0 0
    %1233 = vmatpush1.bf16.msra.mxu0 %v1109
    %1234 = vmatprep.subr.bf16.mxu0 0
    %1235 = vmatpush1.bf16.msra.mxu0 %v1108
    %1236 = vmatprep.subr.bf16.mxu0 0
    %1237 = vmatpush2.bf16.msra.mxu0 %v1123
    %1238 = vmatprep.subr.bf16.mxu0 0
    %1239 = vmatpush2.bf16.msra.mxu0 %v1122
    %1240 = vmatprep.subr.bf16.mxu0 0
    %1241 = vmatpush2.bf16.msra.mxu0 %v1121
    %1242 = vmatprep.subr.bf16.mxu0 0
    %1243 = vmatpush2.bf16.msra.mxu0 %v1120
    %1244 = vmatprep.subr.bf16.mxu0 0
    %1245 = vmatpush2.bf16.msra.mxu0 %v1119
    %1246 = vmatprep.subr.bf16.mxu0 0
    %1247 = vmatpush2.bf16.msra.mxu0 %v1118
    %1248 = vmatprep.subr.bf16.mxu0 0
    %1249 = vmatpush2.bf16.msra.mxu0 %v1117
    %1250 = vmatprep.subr.bf16.mxu0 0
    %1251 = vmatpush2.bf16.msra.mxu0 %v1116
    %1252 = vmatprep.mubr.bf16.mxu0 %v661
    %1253 = vmatmul.mubr.bf16.gmra.mxu0 %v660
    %v1254 = vpop.f32.mrf.mxu0
    %v1255 = vadd.f32 %v306, %v1254
    %v1256 = vpop.f32.mrf.mxu0
    %v1257 = vpop.f32.mrf.mxu0
    %v1258 = vadd.f32 %v306, %v1257
    %v1259 = vpop.f32.mrf.mxu0
    %1260 = vmatprep.mubr.bf16.mxu0 %v668
    %1261 = vmatmul.mubr.bf16.gmra.mxu0 %v667
    %v1262 = vpop.f32.mrf.mxu0
    %v1263 = vadd.f32 %v306, %v1262
    %v1264 = vpop.f32.mrf.mxu0
    %v1265 = vpop.f32.mrf.mxu0
    %v1266 = vadd.f32 %v306, %v1265
    %v1267 = vpop.f32.mrf.mxu0
    %1268 = vmatprep.mubr.bf16.mxu0 %v675
    %1269 = vmatmul.mubr.bf16.gmra.mxu0 %v674
    %v1270 = vpop.f32.mrf.mxu0
    %v1271 = vadd.f32 %v306, %v1270
    %v1272 = vpop.f32.mrf.mxu0
    %v1273 = vpop.f32.mrf.mxu0
    %v1274 = vadd.f32 %v306, %v1273
    %v1275 = vpop.f32.mrf.mxu0
    %1276 = vmatprep.mubr.bf16.mxu0 %v682
    %1277 = vmatmul.mubr.bf16.gmra.mxu0 %v681
    %v1278 = vpop.f32.mrf.mxu0
    %v1279 = vadd.f32 %v306, %v1278
    %v1280 = vpop.f32.mrf.mxu0
    %v1281 = vpop.f32.mrf.mxu0
    %v1282 = vadd.f32 %v306, %v1281
    %v1283 = vpop.f32.mrf.mxu0
    %1284 = vmatprep.mubr.bf16.mxu0 %v689
    %1285 = vmatmul.mubr.bf16.gmra.mxu0 %v688
    %v1286 = vpop.f32.mrf.mxu0
    %v1287 = vadd.f32 %v306, %v1286
    %v1288 = vpop.f32.mrf.mxu0
    %v1289 = vpop.f32.mrf.mxu0
    %v1290 = vadd.f32 %v306, %v1289
    %v1291 = vpop.f32.mrf.mxu0
    %1292 = vmatprep.mubr.bf16.mxu0 %v696
    %1293 = vmatmul.mubr.bf16.gmra.mxu0 %v695
    %v1294 = vpop.f32.mrf.mxu0
    %v1295 = vadd.f32 %v306, %v1294
    %v1296 = vpop.f32.mrf.mxu0
    %v1297 = vpop.f32.mrf.mxu0
    %v1298 = vadd.f32 %v306, %v1297
    %v1299 = vpop.f32.mrf.mxu0
    %1300 = vmatprep.mubr.bf16.mxu0 %v703
    %1301 = vmatmul.mubr.bf16.gmra.mxu0 %v702
    %v1302 = vpop.f32.mrf.mxu0
    %v1303 = vadd.f32 %v306, %v1302
    %v1304 = vpop.f32.mrf.mxu0
    %v1305 = vpop.f32.mrf.mxu0
    %v1306 = vadd.f32 %v306, %v1305
    %v1307 = vpop.f32.mrf.mxu0
    %1308 = vmatprep.mubr.bf16.mxu0 %v710
    %1309 = vmatmul.mubr.bf16.gmra.mxu0 %v709
    %v1310 = vpop.f32.mrf.mxu0
    %v1311 = vadd.f32 %v306, %v1310
    %v1312 = vpop.f32.mrf.mxu0
    %v1313 = vpop.f32.mrf.mxu0
    %v1314 = vadd.f32 %v306, %v1313
    %v1315 = vpop.f32.mrf.mxu0
    %1316 = vmatprep.mubr.bf16.mxu0 %v717
    %1317 = vmatmul.mubr.bf16.gmra.mxu0 %v716
    %v1318 = vpop.f32.mrf.mxu0
    %v1319 = vadd.f32 %v306, %v1318
    %v1320 = vpop.f32.mrf.mxu0
    %v1321 = vpop.f32.mrf.mxu0
    %v1322 = vadd.f32 %v306, %v1321
    %v1323 = vpop.f32.mrf.mxu0
    %1324 = vmatprep.mubr.bf16.mxu0 %v724
    %1325 = vmatmul.mubr.bf16.gmra.mxu0 %v723
    %v1326 = vpop.f32.mrf.mxu0
    %v1327 = vadd.f32 %v306, %v1326
    %v1328 = vpop.f32.mrf.mxu0
    %v1329 = vpop.f32.mrf.mxu0
    %v1330 = vadd.f32 %v306, %v1329
    %v1331 = vpop.f32.mrf.mxu0
    %1332 = vmatprep.mubr.bf16.mxu0 %v731
    %1333 = vmatmul.mubr.bf16.gmra.mxu0 %v730
    %v1334 = vpop.f32.mrf.mxu0
    %v1335 = vadd.f32 %v306, %v1334
    %v1336 = vpop.f32.mrf.mxu0
    %v1337 = vpop.f32.mrf.mxu0
    %v1338 = vadd.f32 %v306, %v1337
    %v1339 = vpop.f32.mrf.mxu0
    %1340 = vmatprep.mubr.bf16.mxu0 %v738
    %1341 = vmatmul.mubr.bf16.gmra.mxu0 %v737
    %v1342 = vpop.f32.mrf.mxu0
    %v1343 = vadd.f32 %v306, %v1342
    %v1344 = vpop.f32.mrf.mxu0
    %v1345 = vpop.f32.mrf.mxu0
    %v1346 = vadd.f32 %v306, %v1345
    %v1347 = vpop.f32.mrf.mxu0
    %1348 = vmatprep.mubr.bf16.mxu0 %v745
    %1349 = vmatmul.mubr.bf16.gmra.mxu0 %v744
    %v1350 = vpop.f32.mrf.mxu0
    %v1351 = vadd.f32 %v306, %v1350
    %v1352 = vpop.f32.mrf.mxu0
    %v1353 = vpop.f32.mrf.mxu0
    %v1354 = vadd.f32 %v306, %v1353
    %v1355 = vpop.f32.mrf.mxu0
    %1356 = vmatprep.mubr.bf16.mxu0 %v752
    %1357 = vmatmul.mubr.bf16.gmra.mxu0 %v751
    %v1358 = vpop.f32.mrf.mxu0
    %v1359 = vadd.f32 %v306, %v1358
    %v1360 = vpop.f32.mrf.mxu0
    %v1361 = vpop.f32.mrf.mxu0
    %v1362 = vadd.f32 %v306, %v1361
    %v1363 = vpop.f32.mrf.mxu0
    %1364 = vmatprep.mubr.bf16.mxu0 %v759
    %1365 = vmatmul.mubr.bf16.gmra.mxu0 %v758
    %v1366 = vpop.f32.mrf.mxu0
    %v1367 = vadd.f32 %v306, %v1366
    %v1368 = vpop.f32.mrf.mxu0
    %v1369 = vpop.f32.mrf.mxu0
    %v1370 = vadd.f32 %v306, %v1369
    %v1371 = vpop.f32.mrf.mxu0
    %1372 = vmatprep.mubr.bf16.mxu0 %v766
    %1373 = vmatmul.mubr.bf16.gmra.mxu0 %v765
    %v1374 = vpop.f32.mrf.mxu0
    %v1375 = vadd.f32 %v306, %v1374
    %v1376 = vpop.f32.mrf.mxu0
    %v1377 = vpop.f32.mrf.mxu0
    %v1378 = vadd.f32 %v306, %v1377
    %v1379 = vpop.f32.mrf.mxu0
    %1380 = vdwg.mxu0
    %1381 = vmatprep.subr.bf16.mxu0 0
    %1382 = vmatpush1.bf16.msra.mxu0 %v1131
    %1383 = vmatprep.subr.bf16.mxu0 0
    %1384 = vmatpush1.bf16.msra.mxu0 %v1130
    %1385 = vmatprep.subr.bf16.mxu0 0
    %1386 = vmatpush1.bf16.msra.mxu0 %v1129
    %1387 = vmatprep.subr.bf16.mxu0 0
    %1388 = vmatpush1.bf16.msra.mxu0 %v1128
    %1389 = vmatprep.subr.bf16.mxu0 0
    %1390 = vmatpush1.bf16.msra.mxu0 %v1127
    %1391 = vmatprep.subr.bf16.mxu0 0
    %1392 = vmatpush1.bf16.msra.mxu0 %v1126
    %1393 = vmatprep.subr.bf16.mxu0 0
    %1394 = vmatpush1.bf16.msra.mxu0 %v1125
    %1395 = vmatprep.subr.bf16.mxu0 0
    %1396 = vmatpush1.bf16.msra.mxu0 %v1124
    %1397 = vmatprep.subr.bf16.mxu0 0
    %1398 = vmatpush2.bf16.msra.mxu0 %v1139
    %1399 = vmatprep.subr.bf16.mxu0 0
    %1400 = vmatpush2.bf16.msra.mxu0 %v1138
    %1401 = vmatprep.subr.bf16.mxu0 0
    %1402 = vmatpush2.bf16.msra.mxu0 %v1137
    %1403 = vmatprep.subr.bf16.mxu0 0
    %1404 = vmatpush2.bf16.msra.mxu0 %v1136
    %1405 = vmatprep.subr.bf16.mxu0 0
    %1406 = vmatpush2.bf16.msra.mxu0 %v1135
    %1407 = vmatprep.subr.bf16.mxu0 0
    %1408 = vmatpush2.bf16.msra.mxu0 %v1134
    %1409 = vmatprep.subr.bf16.mxu0 0
    %1410 = vmatpush2.bf16.msra.mxu0 %v1133
    %1411 = vmatprep.subr.bf16.mxu0 0
    %1412 = vmatpush2.bf16.msra.mxu0 %v1132
    %1413 = vmatprep.mubr.bf16.mxu0 %v663
    %1414 = vmatmul.mubr.bf16.gmra.mxu0 %v662
    %v1415 = vpop.f32.mrf.mxu0
    %v1416 = vadd.f32 %v1255, %v1415
    %v1417 = vpop.f32.mrf.mxu0
    %v1418 = vpop.f32.mrf.mxu0
    %v1419 = vadd.f32 %v1258, %v1418
    %v1420 = vpop.f32.mrf.mxu0
    %1421 = vmatprep.mubr.bf16.mxu0 %v670
    %1422 = vmatmul.mubr.bf16.gmra.mxu0 %v669
    %v1423 = vpop.f32.mrf.mxu0
    %v1424 = vadd.f32 %v1263, %v1423
    %v1425 = vpop.f32.mrf.mxu0
    %v1426 = vpop.f32.mrf.mxu0
    %v1427 = vadd.f32 %v1266, %v1426
    %v1428 = vpop.f32.mrf.mxu0
    %1429 = vmatprep.mubr.bf16.mxu0 %v677
    %1430 = vmatmul.mubr.bf16.gmra.mxu0 %v676
    %v1431 = vpop.f32.mrf.mxu0
    %v1432 = vadd.f32 %v1271, %v1431
    %v1433 = vpop.f32.mrf.mxu0
    %v1434 = vpop.f32.mrf.mxu0
    %v1435 = vadd.f32 %v1274, %v1434
    %v1436 = vpop.f32.mrf.mxu0
    %1437 = vmatprep.mubr.bf16.mxu0 %v684
    %1438 = vmatmul.mubr.bf16.gmra.mxu0 %v683
    %v1439 = vpop.f32.mrf.mxu0
    %v1440 = vadd.f32 %v1279, %v1439
    %v1441 = vpop.f32.mrf.mxu0
    %v1442 = vpop.f32.mrf.mxu0
    %v1443 = vadd.f32 %v1282, %v1442
    %v1444 = vpop.f32.mrf.mxu0
    %1445 = vmatprep.mubr.bf16.mxu0 %v691
    %1446 = vmatmul.mubr.bf16.gmra.mxu0 %v690
    %v1447 = vpop.f32.mrf.mxu0
    %v1448 = vadd.f32 %v1287, %v1447
    %v1449 = vpop.f32.mrf.mxu0
    %v1450 = vpop.f32.mrf.mxu0
    %v1451 = vadd.f32 %v1290, %v1450
    %v1452 = vpop.f32.mrf.mxu0
    %1453 = vmatprep.mubr.bf16.mxu0 %v698
    %1454 = vmatmul.mubr.bf16.gmra.mxu0 %v697
    %v1455 = vpop.f32.mrf.mxu0
    %v1456 = vadd.f32 %v1295, %v1455
    %v1457 = vpop.f32.mrf.mxu0
    %v1458 = vpop.f32.mrf.mxu0
    %v1459 = vadd.f32 %v1298, %v1458
    %v1460 = vpop.f32.mrf.mxu0
    %1461 = vmatprep.mubr.bf16.mxu0 %v705
    %1462 = vmatmul.mubr.bf16.gmra.mxu0 %v704
    %v1463 = vpop.f32.mrf.mxu0
    %v1464 = vadd.f32 %v1303, %v1463
    %v1465 = vpop.f32.mrf.mxu0
    %v1466 = vpop.f32.mrf.mxu0
    %v1467 = vadd.f32 %v1306, %v1466
    %v1468 = vpop.f32.mrf.mxu0
    %1469 = vmatprep.mubr.bf16.mxu0 %v712
    %1470 = vmatmul.mubr.bf16.gmra.mxu0 %v711
    %v1471 = vpop.f32.mrf.mxu0
    %v1472 = vadd.f32 %v1311, %v1471
    %v1473 = vpop.f32.mrf.mxu0
    %v1474 = vpop.f32.mrf.mxu0
    %v1475 = vadd.f32 %v1314, %v1474
    %v1476 = vpop.f32.mrf.mxu0
    %1477 = vmatprep.mubr.bf16.mxu0 %v719
    %1478 = vmatmul.mubr.bf16.gmra.mxu0 %v718
    %v1479 = vpop.f32.mrf.mxu0
    %v1480 = vadd.f32 %v1319, %v1479
    %v1481 = vpop.f32.mrf.mxu0
    %v1482 = vpop.f32.mrf.mxu0
    %v1483 = vadd.f32 %v1322, %v1482
    %v1484 = vpop.f32.mrf.mxu0
    %1485 = vmatprep.mubr.bf16.mxu0 %v726
    %1486 = vmatmul.mubr.bf16.gmra.mxu0 %v725
    %v1487 = vpop.f32.mrf.mxu0
    %v1488 = vadd.f32 %v1327, %v1487
    %v1489 = vpop.f32.mrf.mxu0
    %v1490 = vpop.f32.mrf.mxu0
    %v1491 = vadd.f32 %v1330, %v1490
    %v1492 = vpop.f32.mrf.mxu0
    %1493 = vmatprep.mubr.bf16.mxu0 %v733
    %1494 = vmatmul.mubr.bf16.gmra.mxu0 %v732
    %v1495 = vpop.f32.mrf.mxu0
    %v1496 = vadd.f32 %v1335, %v1495
    %v1497 = vpop.f32.mrf.mxu0
    %v1498 = vpop.f32.mrf.mxu0
    %v1499 = vadd.f32 %v1338, %v1498
    %v1500 = vpop.f32.mrf.mxu0
    %1501 = vmatprep.mubr.bf16.mxu0 %v740
    %1502 = vmatmul.mubr.bf16.gmra.mxu0 %v739
    %v1503 = vpop.f32.mrf.mxu0
    %v1504 = vadd.f32 %v1343, %v1503
    %v1505 = vpop.f32.mrf.mxu0
    %v1506 = vpop.f32.mrf.mxu0
    %v1507 = vadd.f32 %v1346, %v1506
    %v1508 = vpop.f32.mrf.mxu0
    %1509 = vmatprep.mubr.bf16.mxu0 %v747
    %1510 = vmatmul.mubr.bf16.gmra.mxu0 %v746
    %v1511 = vpop.f32.mrf.mxu0
    %v1512 = vadd.f32 %v1351, %v1511
    %v1513 = vpop.f32.mrf.mxu0
    %v1514 = vpop.f32.mrf.mxu0
    %v1515 = vadd.f32 %v1354, %v1514
    %v1516 = vpop.f32.mrf.mxu0
    %1517 = vmatprep.mubr.bf16.mxu0 %v754
    %1518 = vmatmul.mubr.bf16.gmra.mxu0 %v753
    %v1519 = vpop.f32.mrf.mxu0
    %v1520 = vadd.f32 %v1359, %v1519
    %v1521 = vpop.f32.mrf.mxu0
    %v1522 = vpop.f32.mrf.mxu0
    %v1523 = vadd.f32 %v1362, %v1522
    %v1524 = vpop.f32.mrf.mxu0
    %1525 = vmatprep.mubr.bf16.mxu0 %v761
    %1526 = vmatmul.mubr.bf16.gmra.mxu0 %v760
    %v1527 = vpop.f32.mrf.mxu0
    %v1528 = vadd.f32 %v1367, %v1527
    %v1529 = vpop.f32.mrf.mxu0
    %v1530 = vpop.f32.mrf.mxu0
    %v1531 = vadd.f32 %v1370, %v1530
    %v1532 = vpop.f32.mrf.mxu0
    %1533 = vmatprep.mubr.bf16.mxu0 %v768
    %1534 = vmatmul.mubr.bf16.gmra.mxu0 %v767
    %v1535 = vpop.f32.mrf.mxu0
    %v1536 = vadd.f32 %v1375, %v1535
    %v1537 = vpop.f32.mrf.mxu0
    %v1538 = vpop.f32.mrf.mxu0
    %v1539 = vadd.f32 %v1378, %v1538
    %v1540 = vpop.f32.mrf.mxu0
    %1541 = vdwg.mxu0
    %1542 = vmatprep.subr.bf16.mxu0 0
    %1543 = vmatpush1.bf16.msra.mxu0 %v1147
    %1544 = vmatprep.subr.bf16.mxu0 0
    %1545 = vmatpush1.bf16.msra.mxu0 %v1146
    %1546 = vmatprep.subr.bf16.mxu0 0
    %1547 = vmatpush1.bf16.msra.mxu0 %v1145
    %1548 = vmatprep.subr.bf16.mxu0 0
    %1549 = vmatpush1.bf16.msra.mxu0 %v1144
    %1550 = vmatprep.subr.bf16.mxu0 0
    %1551 = vmatpush1.bf16.msra.mxu0 %v1143
    %1552 = vmatprep.subr.bf16.mxu0 0
    %1553 = vmatpush1.bf16.msra.mxu0 %v1142
    %1554 = vmatprep.subr.bf16.mxu0 0
    %1555 = vmatpush1.bf16.msra.mxu0 %v1141
    %1556 = vmatprep.subr.bf16.mxu0 0
    %1557 = vmatpush1.bf16.msra.mxu0 %v1140
    %1558 = vmatprep.subr.bf16.mxu0 0
    %1559 = vmatpush2.bf16.msra.mxu0 %v1155
    %1560 = vmatprep.subr.bf16.mxu0 0
    %1561 = vmatpush2.bf16.msra.mxu0 %v1154
    %1562 = vmatprep.subr.bf16.mxu0 0
    %1563 = vmatpush2.bf16.msra.mxu0 %v1153
    %1564 = vmatprep.subr.bf16.mxu0 0
    %1565 = vmatpush2.bf16.msra.mxu0 %v1152
    %1566 = vmatprep.subr.bf16.mxu0 0
    %1567 = vmatpush2.bf16.msra.mxu0 %v1151
    %1568 = vmatprep.subr.bf16.mxu0 0
    %1569 = vmatpush2.bf16.msra.mxu0 %v1150
    %1570 = vmatprep.subr.bf16.mxu0 0
    %1571 = vmatpush2.bf16.msra.mxu0 %v1149
    %1572 = vmatprep.subr.bf16.mxu0 0
    %1573 = vmatpush2.bf16.msra.mxu0 %v1148
    %1574 = vmatprep.mubr.bf16.mxu0 %v665
    %1575 = vmatmul.mubr.bf16.gmra.mxu0 %v664
    %v1576 = vpop.f32.mrf.mxu0
    %v1577 = vadd.f32 %v1416, %v1576
    %v1578 = vpop.f32.mrf.mxu0
    %v1579 = vpop.f32.mrf.mxu0
    %v1580 = vadd.f32 %v1419, %v1579
    %v1581 = vpop.f32.mrf.mxu0
    %1582 = vmatprep.mubr.bf16.mxu0 %v672
    %1583 = vmatmul.mubr.bf16.gmra.mxu0 %v671
    %v1584 = vpop.f32.mrf.mxu0
    %v1585 = vadd.f32 %v1424, %v1584
    %v1586 = vpop.f32.mrf.mxu0
    %v1587 = vpop.f32.mrf.mxu0
    %v1588 = vadd.f32 %v1427, %v1587
    %v1589 = vpop.f32.mrf.mxu0
    %1590 = vmatprep.mubr.bf16.mxu0 %v679
    %1591 = vmatmul.mubr.bf16.gmra.mxu0 %v678
    %v1592 = vpop.f32.mrf.mxu0
    %v1593 = vadd.f32 %v1432, %v1592
    %v1594 = vpop.f32.mrf.mxu0
    %v1595 = vpop.f32.mrf.mxu0
    %v1596 = vadd.f32 %v1435, %v1595
    %v1597 = vpop.f32.mrf.mxu0
    %1598 = vmatprep.mubr.bf16.mxu0 %v686
    %1599 = vmatmul.mubr.bf16.gmra.mxu0 %v685
    %v1600 = vpop.f32.mrf.mxu0
    %v1601 = vadd.f32 %v1440, %v1600
    %v1602 = vpop.f32.mrf.mxu0
    %v1603 = vpop.f32.mrf.mxu0
    %v1604 = vadd.f32 %v1443, %v1603
    %v1605 = vpop.f32.mrf.mxu0
    %1606 = vmatprep.mubr.bf16.mxu0 %v693
    %1607 = vmatmul.mubr.bf16.gmra.mxu0 %v692
    %v1608 = vpop.f32.mrf.mxu0
    %v1609 = vadd.f32 %v1448, %v1608
    %v1610 = vpop.f32.mrf.mxu0
    %v1611 = vpop.f32.mrf.mxu0
    %v1612 = vadd.f32 %v1451, %v1611
    %v1613 = vpop.f32.mrf.mxu0
    %1614 = vmatprep.mubr.bf16.mxu0 %v700
    %1615 = vmatmul.mubr.bf16.gmra.mxu0 %v699
    %v1616 = vpop.f32.mrf.mxu0
    %v1617 = vadd.f32 %v1456, %v1616
    %v1618 = vpop.f32.mrf.mxu0
    %v1619 = vpop.f32.mrf.mxu0
    %v1620 = vadd.f32 %v1459, %v1619
    %v1621 = vpop.f32.mrf.mxu0
    %1622 = vmatprep.mubr.bf16.mxu0 %v707
    %1623 = vmatmul.mubr.bf16.gmra.mxu0 %v706
    %v1624 = vpop.f32.mrf.mxu0
    %v1625 = vadd.f32 %v1464, %v1624
    %v1626 = vpop.f32.mrf.mxu0
    %v1627 = vpop.f32.mrf.mxu0
    %v1628 = vadd.f32 %v1467, %v1627
    %v1629 = vpop.f32.mrf.mxu0
    %1630 = vmatprep.mubr.bf16.mxu0 %v714
    %1631 = vmatmul.mubr.bf16.gmra.mxu0 %v713
    %v1632 = vpop.f32.mrf.mxu0
    %v1633 = vadd.f32 %v1472, %v1632
    %v1634 = vpop.f32.mrf.mxu0
    %v1635 = vpop.f32.mrf.mxu0
    %v1636 = vadd.f32 %v1475, %v1635
    %v1637 = vpop.f32.mrf.mxu0
    %1638 = vmatprep.mubr.bf16.mxu0 %v721
    %1639 = vmatmul.mubr.bf16.gmra.mxu0 %v720
    %v1640 = vpop.f32.mrf.mxu0
    %v1641 = vadd.f32 %v1480, %v1640
    %v1642 = vpop.f32.mrf.mxu0
    %v1643 = vpop.f32.mrf.mxu0
    %v1644 = vadd.f32 %v1483, %v1643
    %v1645 = vpop.f32.mrf.mxu0
    %1646 = vmatprep.mubr.bf16.mxu0 %v728
    %1647 = vmatmul.mubr.bf16.gmra.mxu0 %v727
    %v1648 = vpop.f32.mrf.mxu0
    %v1649 = vadd.f32 %v1488, %v1648
    %v1650 = vpop.f32.mrf.mxu0
    %v1651 = vpop.f32.mrf.mxu0
    %v1652 = vadd.f32 %v1491, %v1651
    %v1653 = vpop.f32.mrf.mxu0
    %1654 = vmatprep.mubr.bf16.mxu0 %v735
    %1655 = vmatmul.mubr.bf16.gmra.mxu0 %v734
    %v1656 = vpop.f32.mrf.mxu0
    %v1657 = vadd.f32 %v1496, %v1656
    %v1658 = vpop.f32.mrf.mxu0
    %v1659 = vpop.f32.mrf.mxu0
    %v1660 = vadd.f32 %v1499, %v1659
    %v1661 = vpop.f32.mrf.mxu0
    %1662 = vmatprep.mubr.bf16.mxu0 %v742
    %1663 = vmatmul.mubr.bf16.gmra.mxu0 %v741
    %v1664 = vpop.f32.mrf.mxu0
    %v1665 = vadd.f32 %v1504, %v1664
    %v1666 = vpop.f32.mrf.mxu0
    %v1667 = vpop.f32.mrf.mxu0
    %v1668 = vadd.f32 %v1507, %v1667
    %v1669 = vpop.f32.mrf.mxu0
    %1670 = vmatprep.mubr.bf16.mxu0 %v749
    %1671 = vmatmul.mubr.bf16.gmra.mxu0 %v748
    %v1672 = vpop.f32.mrf.mxu0
    %v1673 = vadd.f32 %v1512, %v1672
    %v1674 = vpop.f32.mrf.mxu0
    %v1675 = vpop.f32.mrf.mxu0
    %v1676 = vadd.f32 %v1515, %v1675
    %v1677 = vpop.f32.mrf.mxu0
    %1678 = vmatprep.mubr.bf16.mxu0 %v756
    %1679 = vmatmul.mubr.bf16.gmra.mxu0 %v755
    %v1680 = vpop.f32.mrf.mxu0
    %v1681 = vadd.f32 %v1520, %v1680
    %v1682 = vpop.f32.mrf.mxu0
    %v1683 = vpop.f32.mrf.mxu0
    %v1684 = vadd.f32 %v1523, %v1683
    %v1685 = vpop.f32.mrf.mxu0
    %1686 = vmatprep.mubr.bf16.mxu0 %v763
    %1687 = vmatmul.mubr.bf16.gmra.mxu0 %v762
    %v1688 = vpop.f32.mrf.mxu0
    %v1689 = vadd.f32 %v1528, %v1688
    %v1690 = vpop.f32.mrf.mxu0
    %v1691 = vpop.f32.mrf.mxu0
    %v1692 = vadd.f32 %v1531, %v1691
    %v1693 = vpop.f32.mrf.mxu0
    %1694 = vmatprep.mubr.bf16.mxu0 %v770
    %1695 = vmatmul.mubr.bf16.gmra.mxu0 %v769
    %v1696 = vpop.f32.mrf.mxu0
    %v1697 = vadd.f32 %v1536, %v1696
    %v1698 = vpop.f32.mrf.mxu0
    %v1699 = vpop.f32.mrf.mxu0
    %v1700 = vadd.f32 %v1539, %v1699
    %v1701 = vpop.f32.mrf.mxu0
    %1702 = vdwg.mxu0
    %1703 = vmatprep.subr.bf16.mxu0 0
    %1704 = vmatpush1.bf16.msra.mxu0 %v1163
    %1705 = vmatprep.subr.bf16.mxu0 0
    %1706 = vmatpush1.bf16.msra.mxu0 %v1162
    %1707 = vmatprep.subr.bf16.mxu0 0
    %1708 = vmatpush1.bf16.msra.mxu0 %v1161
    %1709 = vmatprep.subr.bf16.mxu0 0
    %1710 = vmatpush1.bf16.msra.mxu0 %v1160
    %1711 = vmatprep.subr.bf16.mxu0 0
    %1712 = vmatpush1.bf16.msra.mxu0 %v1159
    %1713 = vmatprep.subr.bf16.mxu0 0
    %1714 = vmatpush1.bf16.msra.mxu0 %v1158
    %1715 = vmatprep.subr.bf16.mxu0 0
    %1716 = vmatpush1.bf16.msra.mxu0 %v1157
    %1717 = vmatprep.subr.bf16.mxu0 0
    %1718 = vmatpush1.bf16.msra.mxu0 %v1156
    %1719 = vmatprep.subr.bf16.mxu0 0
    %1720 = vmatpush2.bf16.msra.mxu0 0
    %1721 = vmatprep.subr.bf16.mxu0 0
    %1722 = vmatpush2.bf16.msra.mxu0 0
    %1723 = vmatprep.subr.bf16.mxu0 0
    %1724 = vmatpush2.bf16.msra.mxu0 0
    %1725 = vmatprep.subr.bf16.mxu0 0
    %1726 = vmatpush2.bf16.msra.mxu0 0
    %1727 = vmatprep.subr.bf16.mxu0 0
    %1728 = vmatpush2.bf16.msra.mxu0 0
    %1729 = vmatprep.subr.bf16.mxu0 0
    %1730 = vmatpush2.bf16.msra.mxu0 0
    %1731 = vmatprep.subr.bf16.mxu0 0
    %1732 = vmatpush2.bf16.msra.mxu0 0
    %1733 = vmatprep.subr.bf16.mxu0 0
    %1734 = vmatpush2.bf16.msra.mxu0 0
    %1735 = vmatprep.mubr.bf16.mxu0 0
    %1736 = vmatmul.mubr.bf16.gmra.mxu0 %v666
    %v1737 = vpop.f32.mrf.mxu0
    %v1738 = vadd.f32 %v1577, %v1737
    %v1739 = vpop.f32.mrf.mxu0
    %v1740 = vpop.f32.mrf.mxu0
    %v1741 = vadd.f32 %v1580, %v1740
    %v1742 = vpop.f32.mrf.mxu0
    %1743 = vmatprep.mubr.bf16.mxu0 0
    %1744 = vmatmul.mubr.bf16.gmra.mxu0 %v673
    %v1745 = vpop.f32.mrf.mxu0
    %v1746 = vadd.f32 %v1585, %v1745
    %v1747 = vpop.f32.mrf.mxu0
    %v1748 = vpop.f32.mrf.mxu0
    %v1749 = vadd.f32 %v1588, %v1748
    %v1750 = vpop.f32.mrf.mxu0
    %1751 = vmatprep.mubr.bf16.mxu0 0
    %1752 = vmatmul.mubr.bf16.gmra.mxu0 %v680
    %v1753 = vpop.f32.mrf.mxu0
    %v1754 = vadd.f32 %v1593, %v1753
    %v1755 = vpop.f32.mrf.mxu0
    %v1756 = vpop.f32.mrf.mxu0
    %v1757 = vadd.f32 %v1596, %v1756
    %v1758 = vpop.f32.mrf.mxu0
    %1759 = vmatprep.mubr.bf16.mxu0 0
    %1760 = vmatmul.mubr.bf16.gmra.mxu0 %v687
    %v1761 = vpop.f32.mrf.mxu0
    %v1762 = vadd.f32 %v1601, %v1761
    %v1763 = vpop.f32.mrf.mxu0
    %v1764 = vpop.f32.mrf.mxu0
    %v1765 = vadd.f32 %v1604, %v1764
    %v1766 = vpop.f32.mrf.mxu0
    %1767 = vmatprep.mubr.bf16.mxu0 0
    %1768 = vmatmul.mubr.bf16.gmra.mxu0 %v694
    %v1769 = vpop.f32.mrf.mxu0
    %v1770 = vadd.f32 %v1609, %v1769
    %v1771 = vpop.f32.mrf.mxu0
    %v1772 = vpop.f32.mrf.mxu0
    %v1773 = vadd.f32 %v1612, %v1772
    %v1774 = vpop.f32.mrf.mxu0
    %1775 = vmatprep.mubr.bf16.mxu0 0
    %1776 = vmatmul.mubr.bf16.gmra.mxu0 %v701
    %v1777 = vpop.f32.mrf.mxu0
    %v1778 = vadd.f32 %v1617, %v1777
    %v1779 = vpop.f32.mrf.mxu0
    %v1780 = vpop.f32.mrf.mxu0
    %v1781 = vadd.f32 %v1620, %v1780
    %v1782 = vpop.f32.mrf.mxu0
    %1783 = vmatprep.mubr.bf16.mxu0 0
    %1784 = vmatmul.mubr.bf16.gmra.mxu0 %v708
    %v1785 = vpop.f32.mrf.mxu0
    %v1786 = vadd.f32 %v1625, %v1785
    %v1787 = vpop.f32.mrf.mxu0
    %v1788 = vpop.f32.mrf.mxu0
    %v1789 = vadd.f32 %v1628, %v1788
    %v1790 = vpop.f32.mrf.mxu0
    %1791 = vmatprep.mubr.bf16.mxu0 0
    %1792 = vmatmul.mubr.bf16.gmra.mxu0 %v715
    %v1793 = vpop.f32.mrf.mxu0
    %v1794 = vadd.f32 %v1633, %v1793
    %v1795 = vpop.f32.mrf.mxu0
    %v1796 = vpop.f32.mrf.mxu0
    %v1797 = vadd.f32 %v1636, %v1796
    %v1798 = vpop.f32.mrf.mxu0
    %1799 = vmatprep.mubr.bf16.mxu0 0
    %1800 = vmatmul.mubr.bf16.gmra.mxu0 %v722
    %v1801 = vpop.f32.mrf.mxu0
    %v1802 = vadd.f32 %v1641, %v1801
    %v1803 = vpop.f32.mrf.mxu0
    %v1804 = vpop.f32.mrf.mxu0
    %v1805 = vadd.f32 %v1644, %v1804
    %v1806 = vpop.f32.mrf.mxu0
    %1807 = vmatprep.mubr.bf16.mxu0 0
    %1808 = vmatmul.mubr.bf16.gmra.mxu0 %v729
    %v1809 = vpop.f32.mrf.mxu0
    %v1810 = vadd.f32 %v1649, %v1809
    %v1811 = vpop.f32.mrf.mxu0
    %v1812 = vpop.f32.mrf.mxu0
    %v1813 = vadd.f32 %v1652, %v1812
    %v1814 = vpop.f32.mrf.mxu0
    %1815 = vmatprep.mubr.bf16.mxu0 0
    %1816 = vmatmul.mubr.bf16.gmra.mxu0 %v736
    %v1817 = vpop.f32.mrf.mxu0
    %v1818 = vadd.f32 %v1657, %v1817
    %v1819 = vpop.f32.mrf.mxu0
    %v1820 = vpop.f32.mrf.mxu0
    %v1821 = vadd.f32 %v1660, %v1820
    %v1822 = vpop.f32.mrf.mxu0
    %1823 = vmatprep.mubr.bf16.mxu0 0
    %1824 = vmatmul.mubr.bf16.gmra.mxu0 %v743
    %v1825 = vpop.f32.mrf.mxu0
    %v1826 = vadd.f32 %v1665, %v1825
    %v1827 = vpop.f32.mrf.mxu0
    %v1828 = vpop.f32.mrf.mxu0
    %v1829 = vadd.f32 %v1668, %v1828
    %v1830 = vpop.f32.mrf.mxu0
    %1831 = vmatprep.mubr.bf16.mxu0 0
    %1832 = vmatmul.mubr.bf16.gmra.mxu0 %v750
    %v1833 = vpop.f32.mrf.mxu0
    %v1834 = vadd.f32 %v1673, %v1833
    %v1835 = vpop.f32.mrf.mxu0
    %v1836 = vpop.f32.mrf.mxu0
    %v1837 = vadd.f32 %v1676, %v1836
    %v1838 = vpop.f32.mrf.mxu0
    %1839 = vmatprep.mubr.bf16.mxu0 0
    %1840 = vmatmul.mubr.bf16.gmra.mxu0 %v757
    %v1841 = vpop.f32.mrf.mxu0
    %v1842 = vadd.f32 %v1681, %v1841
    %v1843 = vpop.f32.mrf.mxu0
    %v1844 = vpop.f32.mrf.mxu0
    %v1845 = vadd.f32 %v1684, %v1844
    %v1846 = vpop.f32.mrf.mxu0
    %1847 = vmatprep.mubr.bf16.mxu0 0
    %1848 = vmatmul.mubr.bf16.gmra.mxu0 %v764
    %v1849 = vpop.f32.mrf.mxu0
    %v1850 = vadd.f32 %v1689, %v1849
    %v1851 = vpop.f32.mrf.mxu0
    %v1852 = vpop.f32.mrf.mxu0
    %v1853 = vadd.f32 %v1692, %v1852
    %v1854 = vpop.f32.mrf.mxu0
    %1855 = vmatprep.mubr.bf16.mxu0 0
    %1856 = vmatmul.mubr.bf16.gmra.mxu0 %v771
    %v1857 = vpop.f32.mrf.mxu0
    %v1858 = vadd.f32 %v1697, %v1857
    %v1859 = vpop.f32.mrf.mxu0
    %v1860 = vpop.f32.mrf.mxu0
    %v1861 = vadd.f32 %v1700, %v1860
    %v1862 = vpop.f32.mrf.mxu0
    %1863 = vdwg.mxu0
    %v1864 = vmax.f32 %v1738, 0.0
    %v1865 = vmax.f32 %v1741, 0.0
    %v1866 = vmax.f32 %v1746, 0.0
    %v1867 = vmax.f32 %v1749, 0.0
    %v1868 = vmax.f32 %v1754, 0.0
    %v1869 = vmax.f32 %v1757, 0.0
    %v1870 = vmax.f32 %v1762, 0.0
    %v1871 = vmax.f32 %v1765, 0.0
    %v1872 = vmax.f32 %v1770, 0.0
    %v1873 = vmax.f32 %v1773, 0.0
    %v1874 = vmax.f32 %v1778, 0.0
    %v1875 = vmax.f32 %v1781, 0.0
    %v1876 = vmax.f32 %v1786, 0.0
    %v1877 = vmax.f32 %v1789, 0.0
    %v1878 = vmax.f32 %v1794, 0.0
    %v1879 = vmax.f32 %v1797, 0.0
    %v1880 = vmax.f32 %v1802, 0.0
    %v1881 = vmax.f32 %v1805, 0.0
    %v1882 = vmax.f32 %v1810, 0.0
    %v1883 = vmax.f32 %v1813, 0.0
    %v1884 = vmax.f32 %v1818, 0.0
    %v1885 = vmax.f32 %v1821, 0.0
    %v1886 = vmax.f32 %v1826, 0.0
    %v1887 = vmax.f32 %v1829, 0.0
    %v1888 = vmax.f32 %v1834, 0.0
    %v1889 = vmax.f32 %v1837, 0.0
    %v1890 = vmax.f32 %v1842, 0.0
    %v1891 = vmax.f32 %v1845, 0.0
    %v1892 = vmax.f32 %v1850, 0.0
    %v1893 = vmax.f32 %v1853, 0.0
    %v1894 = vmax.f32 %v1858, 0.0
    %v1895 = vmax.f32 %v1861, 0.0
    %v1896 = vld [vmem:[%s3] sm:$0xff]
    %v1897 = vld [vmem:[%s3 + $0x8] sm:$0xff]
    %v1898 = vld [vmem:[%s3 + $0x10] sm:$0xff]
    %v1899 = vld [vmem:[%s3 + $0x18] sm:$0xff]
    %v1900 = vld [vmem:[%s3 + $0x20] sm:$0xff]
    %v1901 = vld [vmem:[%s3 + $0x28] sm:$0xff]
    %v1902 = vld [vmem:[%s3 + $0x30] sm:$0xff]
    %v1903 = vld [vmem:[%s3 + $0x38] sm:$0xff]
    %v1904 = vld [vmem:[%s3 + $0x40] sm:$0xff]
    %v1905 = vld [vmem:[%s3 + $0x48] sm:$0xff]
    %v1906 = vld [vmem:[%s3 + $0x50] sm:$0xff]
    %v1907 = vld [vmem:[%s3 + $0x58] sm:$0xff]
    %v1908 = vld [vmem:[%s3 + $0x60] sm:$0xff]
    %v1909 = vld [vmem:[%s3 + $0x68] sm:$0xff]
    %v1910 = vld [vmem:[%s3 + $0x70] sm:$0xff]
    %v1911 = vld [vmem:[%s3 + $0x78] sm:$0xff]
    %v1912 = vld [vmem:[%s4] sm:$0x1]
    %v1914 = vlaneseq
    %v1915 = vshrl.u32 %v1914, 7
    %v1916 = vsub.s32 0, %v1915
    %v1917 = vrot.slane %v1912, %v1916
    %1919 = vmatprep.subr.mxu0 0.0
    %1920 = vmatpush1.msra.mxu0 %v1911
    %1921 = vmatprep.subr.mxu0 0.0
    %1922 = vmatpush1.msra.mxu0 %v1910
    %1923 = vmatprep.subr.mxu0 0.0
    %1924 = vmatpush1.msra.mxu0 %v1909
    %1925 = vmatprep.subr.mxu0 0.0
    %1926 = vmatpush1.msra.mxu0 %v1908
    %1927 = vmatprep.subr.mxu0 0.0
    %1928 = vmatpush1.msra.mxu0 %v1907
    %1929 = vmatprep.subr.mxu0 0.0
    %1930 = vmatpush1.msra.mxu0 %v1906
    %1931 = vmatprep.subr.mxu0 0.0
    %1932 = vmatpush1.msra.mxu0 %v1905
    %1933 = vmatprep.subr.mxu0 0.0
    %1934 = vmatpush1.msra.mxu0 %v1904
    %1935 = vmatprep.subr.mxu0 0.0
    %1936 = vmatpush1.msra.mxu0 %v1903
    %1937 = vmatprep.subr.mxu0 0.0
    %1938 = vmatpush1.msra.mxu0 %v1902
    %1939 = vmatprep.subr.mxu0 0.0
    %1940 = vmatpush1.msra.mxu0 %v1901
    %1941 = vmatprep.subr.mxu0 0.0
    %1942 = vmatpush1.msra.mxu0 %v1900
    %1943 = vmatprep.subr.mxu0 0.0
    %1944 = vmatpush1.msra.mxu0 %v1899
    %1945 = vmatprep.subr.mxu0 0.0
    %1946 = vmatpush1.msra.mxu0 %v1898
    %1947 = vmatprep.subr.mxu0 0.0
    %1948 = vmatpush1.msra.mxu0 %v1897
    %1949 = vmatprep.subr.mxu0 0.0
    %1950 = vmatpush1.msra.mxu0 %v1896
    %1951 = vmatprep.subr.mxu0 0.0
    %1952 = vmatpush2.msra.mxu0 0.0
    %1953 = vmatprep.subr.mxu0 0.0
    %1954 = vmatpush2.msra.mxu0 0.0
    %1955 = vmatprep.subr.mxu0 0.0
    %1956 = vmatpush2.msra.mxu0 0.0
    %1957 = vmatprep.subr.mxu0 0.0
    %1958 = vmatpush2.msra.mxu0 0.0
    %1959 = vmatprep.subr.mxu0 0.0
    %1960 = vmatpush2.msra.mxu0 0.0
    %1961 = vmatprep.subr.mxu0 0.0
    %1962 = vmatpush2.msra.mxu0 0.0
    %1963 = vmatprep.subr.mxu0 0.0
    %1964 = vmatpush2.msra.mxu0 0.0
    %1965 = vmatprep.subr.mxu0 0.0
    %1966 = vmatpush2.msra.mxu0 0.0
    %1967 = vmatprep.subr.mxu0 0.0
    %1968 = vmatpush2.msra.mxu0 0.0
    %1969 = vmatprep.subr.mxu0 0.0
    %1970 = vmatpush2.msra.mxu0 0.0
    %1971 = vmatprep.subr.mxu0 0.0
    %1972 = vmatpush2.msra.mxu0 0.0
    %1973 = vmatprep.subr.mxu0 0.0
    %1974 = vmatpush2.msra.mxu0 0.0
    %1975 = vmatprep.subr.mxu0 0.0
    %1976 = vmatpush2.msra.mxu0 0.0
    %1977 = vmatprep.subr.mxu0 0.0
    %1978 = vmatpush2.msra.mxu0 0.0
    %1979 = vmatprep.subr.mxu0 0.0
    %1980 = vmatpush2.msra.mxu0 0.0
    %1981 = vmatprep.subr.mxu0 0.0
    %1982 = vmatpush2.msra.mxu0 0.0
    %1983 = vmatprep.mubr.f32.mxu0 0.0
    %1984 = vmatmul.mubr.f32.gmra.mxu0 %v1864
    %v1985 = vpop.f32.mrf.mxu0
    %v1986 = vadd.f32 %v1917, %v1985
    %v1987 = vpop.f32.mrf.mxu0
    %1988 = vmatprep.mubr.f32.mxu0 0.0
    %1989 = vmatmul.mubr.f32.gmra.mxu0 %v1865
    %v1990 = vpop.f32.mrf.mxu0
    %v1991 = vadd.f32 %v1917, %v1990
    %v1992 = vpop.f32.mrf.mxu0
    %1993 = vmatprep.mubr.f32.mxu0 0.0
    %1994 = vmatmul.mubr.f32.gmra.mxu0 %v1866
    %v1995 = vpop.f32.mrf.mxu0
    %v1996 = vadd.f32 %v1917, %v1995
    %v1997 = vpop.f32.mrf.mxu0
    %1998 = vmatprep.mubr.f32.mxu0 0.0
    %1999 = vmatmul.mubr.f32.gmra.mxu0 %v1867
    %v2000 = vpop.f32.mrf.mxu0
    %v2001 = vadd.f32 %v1917, %v2000
    %v2002 = vpop.f32.mrf.mxu0
    %2003 = vmatprep.mubr.f32.mxu0 0.0
    %2004 = vmatmul.mubr.f32.gmra.mxu0 %v1868
    %v2005 = vpop.f32.mrf.mxu0
    %v2006 = vadd.f32 %v1917, %v2005
    %v2007 = vpop.f32.mrf.mxu0
    %2008 = vmatprep.mubr.f32.mxu0 0.0
    %2009 = vmatmul.mubr.f32.gmra.mxu0 %v1869
    %v2010 = vpop.f32.mrf.mxu0
    %v2011 = vadd.f32 %v1917, %v2010
    %v2012 = vpop.f32.mrf.mxu0
    %2013 = vmatprep.mubr.f32.mxu0 0.0
    %2014 = vmatmul.mubr.f32.gmra.mxu0 %v1870
    %v2015 = vpop.f32.mrf.mxu0
    %v2016 = vadd.f32 %v1917, %v2015
    %v2017 = vpop.f32.mrf.mxu0
    %2018 = vmatprep.mubr.f32.mxu0 0.0
    %2019 = vmatmul.mubr.f32.gmra.mxu0 %v1871
    %v2020 = vpop.f32.mrf.mxu0
    %v2021 = vadd.f32 %v1917, %v2020
    %v2022 = vpop.f32.mrf.mxu0
    %2023 = vmatprep.mubr.f32.mxu0 0.0
    %2024 = vmatmul.mubr.f32.gmra.mxu0 %v1872
    %v2025 = vpop.f32.mrf.mxu0
    %v2026 = vadd.f32 %v1917, %v2025
    %v2027 = vpop.f32.mrf.mxu0
    %2028 = vmatprep.mubr.f32.mxu0 0.0
    %2029 = vmatmul.mubr.f32.gmra.mxu0 %v1873
    %v2030 = vpop.f32.mrf.mxu0
    %v2031 = vadd.f32 %v1917, %v2030
    %v2032 = vpop.f32.mrf.mxu0
    %2033 = vmatprep.mubr.f32.mxu0 0.0
    %2034 = vmatmul.mubr.f32.gmra.mxu0 %v1874
    %v2035 = vpop.f32.mrf.mxu0
    %v2036 = vadd.f32 %v1917, %v2035
    %v2037 = vpop.f32.mrf.mxu0
    %2038 = vmatprep.mubr.f32.mxu0 0.0
    %2039 = vmatmul.mubr.f32.gmra.mxu0 %v1875
    %v2040 = vpop.f32.mrf.mxu0
    %v2041 = vadd.f32 %v1917, %v2040
    %v2042 = vpop.f32.mrf.mxu0
    %2043 = vmatprep.mubr.f32.mxu0 0.0
    %2044 = vmatmul.mubr.f32.gmra.mxu0 %v1876
    %v2045 = vpop.f32.mrf.mxu0
    %v2046 = vadd.f32 %v1917, %v2045
    %v2047 = vpop.f32.mrf.mxu0
    %2048 = vmatprep.mubr.f32.mxu0 0.0
    %2049 = vmatmul.mubr.f32.gmra.mxu0 %v1877
    %v2050 = vpop.f32.mrf.mxu0
    %v2051 = vadd.f32 %v1917, %v2050
    %v2052 = vpop.f32.mrf.mxu0
    %2053 = vmatprep.mubr.f32.mxu0 0.0
    %2054 = vmatmul.mubr.f32.gmra.mxu0 %v1878
    %v2055 = vpop.f32.mrf.mxu0
    %v2056 = vadd.f32 %v1917, %v2055
    %v2057 = vpop.f32.mrf.mxu0
    %2058 = vmatprep.mubr.f32.mxu0 0.0
    %2059 = vmatmul.mubr.f32.gmra.mxu0 %v1879
    %v2060 = vpop.f32.mrf.mxu0
    %v2061 = vadd.f32 %v1917, %v2060
    %v2062 = vpop.f32.mrf.mxu0
    %2063 = vmatprep.mubr.f32.mxu0 0.0
    %2064 = vmatmul.mubr.f32.gmra.mxu0 %v1880
    %v2065 = vpop.f32.mrf.mxu0
    %v2066 = vadd.f32 %v1917, %v2065
    %v2067 = vpop.f32.mrf.mxu0
    %2068 = vmatprep.mubr.f32.mxu0 0.0
    %2069 = vmatmul.mubr.f32.gmra.mxu0 %v1881
    %v2070 = vpop.f32.mrf.mxu0
    %v2071 = vadd.f32 %v1917, %v2070
    %v2072 = vpop.f32.mrf.mxu0
    %2073 = vmatprep.mubr.f32.mxu0 0.0
    %2074 = vmatmul.mubr.f32.gmra.mxu0 %v1882
    %v2075 = vpop.f32.mrf.mxu0
    %v2076 = vadd.f32 %v1917, %v2075
    %v2077 = vpop.f32.mrf.mxu0
    %2078 = vmatprep.mubr.f32.mxu0 0.0
    %2079 = vmatmul.mubr.f32.gmra.mxu0 %v1883
    %v2080 = vpop.f32.mrf.mxu0
    %v2081 = vadd.f32 %v1917, %v2080
    %v2082 = vpop.f32.mrf.mxu0
    %2083 = vmatprep.mubr.f32.mxu0 0.0
    %2084 = vmatmul.mubr.f32.gmra.mxu0 %v1884
    %v2085 = vpop.f32.mrf.mxu0
    %v2086 = vadd.f32 %v1917, %v2085
    %v2087 = vpop.f32.mrf.mxu0
    %2088 = vmatprep.mubr.f32.mxu0 0.0
    %2089 = vmatmul.mubr.f32.gmra.mxu0 %v1885
    %v2090 = vpop.f32.mrf.mxu0
    %v2091 = vadd.f32 %v1917, %v2090
    %v2092 = vpop.f32.mrf.mxu0
    %2093 = vmatprep.mubr.f32.mxu0 0.0
    %2094 = vmatmul.mubr.f32.gmra.mxu0 %v1886
    %v2095 = vpop.f32.mrf.mxu0
    %v2096 = vadd.f32 %v1917, %v2095
    %v2097 = vpop.f32.mrf.mxu0
    %2098 = vmatprep.mubr.f32.mxu0 0.0
    %2099 = vmatmul.mubr.f32.gmra.mxu0 %v1887
    %v2100 = vpop.f32.mrf.mxu0
    %v2101 = vadd.f32 %v1917, %v2100
    %v2102 = vpop.f32.mrf.mxu0
    %2103 = vmatprep.mubr.f32.mxu0 0.0
    %2104 = vmatmul.mubr.f32.gmra.mxu0 %v1888
    %v2105 = vpop.f32.mrf.mxu0
    %v2106 = vadd.f32 %v1917, %v2105
    %v2107 = vpop.f32.mrf.mxu0
    %2108 = vmatprep.mubr.f32.mxu0 0.0
    %2109 = vmatmul.mubr.f32.gmra.mxu0 %v1889
    %v2110 = vpop.f32.mrf.mxu0
    %v2111 = vadd.f32 %v1917, %v2110
    %v2112 = vpop.f32.mrf.mxu0
    %2113 = vmatprep.mubr.f32.mxu0 0.0
    %2114 = vmatmul.mubr.f32.gmra.mxu0 %v1890
    %v2115 = vpop.f32.mrf.mxu0
    %v2116 = vadd.f32 %v1917, %v2115
    %v2117 = vpop.f32.mrf.mxu0
    %2118 = vmatprep.mubr.f32.mxu0 0.0
    %2119 = vmatmul.mubr.f32.gmra.mxu0 %v1891
    %v2120 = vpop.f32.mrf.mxu0
    %v2121 = vadd.f32 %v1917, %v2120
    %v2122 = vpop.f32.mrf.mxu0
    %2123 = vmatprep.mubr.f32.mxu0 0.0
    %2124 = vmatmul.mubr.f32.gmra.mxu0 %v1892
    %v2125 = vpop.f32.mrf.mxu0
    %v2126 = vadd.f32 %v1917, %v2125
    %v2127 = vpop.f32.mrf.mxu0
    %2128 = vmatprep.mubr.f32.mxu0 0.0
    %2129 = vmatmul.mubr.f32.gmra.mxu0 %v1893
    %v2130 = vpop.f32.mrf.mxu0
    %v2131 = vadd.f32 %v1917, %v2130
    %v2132 = vpop.f32.mrf.mxu0
    %2133 = vmatprep.mubr.f32.mxu0 0.0
    %2134 = vmatmul.mubr.f32.gmra.mxu0 %v1894
    %v2135 = vpop.f32.mrf.mxu0
    %v2136 = vadd.f32 %v1917, %v2135
    %v2137 = vpop.f32.mrf.mxu0
    %2138 = vmatprep.mubr.f32.mxu0 0.0
    %2139 = vmatmul.mubr.f32.gmra.mxu0 %v1895
    %v2140 = vpop.f32.mrf.mxu0
    %v2141 = vadd.f32 %v1917, %v2140
    %v2142 = vpop.f32.mrf.mxu0
    %2143 = vdwg.mxu0
    %v2144 = vld [vmem:[%s5] sm:$0xff]
    %v2145 = vld [vmem:[%s5 + $0x8] sm:$0xff]
    %v2146 = vld [vmem:[%s5 + $0x10] sm:$0xff]
    %v2147 = vld [vmem:[%s5 + $0x18] sm:$0xff]
    %v2148 = vld [vmem:[%s5 + $0x20] sm:$0xff]
    %v2149 = vld [vmem:[%s5 + $0x28] sm:$0xff]
    %v2150 = vld [vmem:[%s5 + $0x30] sm:$0xff]
    %v2151 = vld [vmem:[%s5 + $0x38] sm:$0xff]
    %v2152 = vld [vmem:[%s6] sm:$0x1]
    %v2154 = vlaneseq
    %v2155 = vshrl.u32 %v2154, 7
    %v2156 = vsub.s32 0, %v2155
    %v2157 = vrot.slane %v2152, %v2156
    %vm2159 = vcmask 523264
    %v2161 = vsel %vm2159, %v1986, 0
    %v2164 = vsel %vm2159, %v1991, 0
    %v2167 = vsel %vm2159, %v1996, 0
    %v2170 = vsel %vm2159, %v2001, 0
    %v2173 = vsel %vm2159, %v2006, 0
    %v2176 = vsel %vm2159, %v2011, 0
    %v2179 = vsel %vm2159, %v2016, 0
    %v2182 = vsel %vm2159, %v2021, 0
    %v2185 = vsel %vm2159, %v2026, 0
    %v2188 = vsel %vm2159, %v2031, 0
    %v2191 = vsel %vm2159, %v2036, 0
    %v2194 = vsel %vm2159, %v2041, 0
    %v2197 = vsel %vm2159, %v2046, 0
    %v2200 = vsel %vm2159, %v2051, 0
    %v2203 = vsel %vm2159, %v2056, 0
    %v2206 = vsel %vm2159, %v2061, 0
    %v2209 = vsel %vm2159, %v2066, 0
    %v2212 = vsel %vm2159, %v2071, 0
    %v2215 = vsel %vm2159, %v2076, 0
    %v2218 = vsel %vm2159, %v2081, 0
    %v2221 = vsel %vm2159, %v2086, 0
    %v2224 = vsel %vm2159, %v2091, 0
    %v2227 = vsel %vm2159, %v2096, 0
    %v2230 = vsel %vm2159, %v2101, 0
    %v2233 = vsel %vm2159, %v2106, 0
    %v2236 = vsel %vm2159, %v2111, 0
    %v2239 = vsel %vm2159, %v2116, 0
    %v2242 = vsel %vm2159, %v2121, 0
    %v2245 = vsel %vm2159, %v2126, 0
    %v2248 = vsel %vm2159, %v2131, 0
    %v2251 = vsel %vm2159, %v2136, 0
    %v2254 = vsel %vm2159, %v2141, 0
    %2256 = vmatprep.subr.mxu0 0.0
    %2257 = vmatpush1.msra.mxu0 0.0
    %2258 = vmatprep.subr.mxu0 0.0
    %2259 = vmatpush1.msra.mxu0 0.0
    %2260 = vmatprep.subr.mxu0 0.0
    %2261 = vmatpush1.msra.mxu0 0.0
    %2262 = vmatprep.subr.mxu0 0.0
    %2263 = vmatpush1.msra.mxu0 0.0
    %2264 = vmatprep.subr.mxu0 0.0
    %2265 = vmatpush1.msra.mxu0 0.0
    %2266 = vmatprep.subr.mxu0 0.0
    %2267 = vmatpush1.msra.mxu0 0.0
    %2268 = vmatprep.subr.mxu0 0.0
    %2269 = vmatpush1.msra.mxu0 0.0
    %2270 = vmatprep.subr.mxu0 0.0
    %2271 = vmatpush1.msra.mxu0 0.0
    %2272 = vmatprep.subr.mxu0 0.0
    %2273 = vmatpush1.msra.mxu0 %v2151
    %2274 = vmatprep.subr.mxu0 0.0
    %2275 = vmatpush1.msra.mxu0 %v2150
    %2276 = vmatprep.subr.mxu0 0.0
    %2277 = vmatpush1.msra.mxu0 %v2149
    %2278 = vmatprep.subr.mxu0 0.0
    %2279 = vmatpush1.msra.mxu0 %v2148
    %2280 = vmatprep.subr.mxu0 0.0
    %2281 = vmatpush1.msra.mxu0 %v2147
    %2282 = vmatprep.subr.mxu0 0.0
    %2283 = vmatpush1.msra.mxu0 %v2146
    %2284 = vmatprep.subr.mxu0 0.0
    %2285 = vmatpush1.msra.mxu0 %v2145
    %2286 = vmatprep.subr.mxu0 0.0
    %2287 = vmatpush1.msra.mxu0 %v2144
    %2288 = vmatprep.subr.mxu0 0.0
    %2289 = vmatpush2.msra.mxu0 0.0
    %2290 = vmatprep.subr.mxu0 0.0
    %2291 = vmatpush2.msra.mxu0 0.0
    %2292 = vmatprep.subr.mxu0 0.0
    %2293 = vmatpush2.msra.mxu0 0.0
    %2294 = vmatprep.subr.mxu0 0.0
    %2295 = vmatpush2.msra.mxu0 0.0
    %2296 = vmatprep.subr.mxu0 0.0
    %2297 = vmatpush2.msra.mxu0 0.0
    %2298 = vmatprep.subr.mxu0 0.0
    %2299 = vmatpush2.msra.mxu0 0.0
    %2300 = vmatprep.subr.mxu0 0.0
    %2301 = vmatpush2.msra.mxu0 0.0
    %2302 = vmatprep.subr.mxu0 0.0
    %2303 = vmatpush2.msra.mxu0 0.0
    %2304 = vmatprep.subr.mxu0 0.0
    %2305 = vmatpush2.msra.mxu0 0.0
    %2306 = vmatprep.subr.mxu0 0.0
    %2307 = vmatpush2.msra.mxu0 0.0
    %2308 = vmatprep.subr.mxu0 0.0
    %2309 = vmatpush2.msra.mxu0 0.0
    %2310 = vmatprep.subr.mxu0 0.0
    %2311 = vmatpush2.msra.mxu0 0.0
    %2312 = vmatprep.subr.mxu0 0.0
    %2313 = vmatpush2.msra.mxu0 0.0
    %2314 = vmatprep.subr.mxu0 0.0
    %2315 = vmatpush2.msra.mxu0 0.0
    %2316 = vmatprep.subr.mxu0 0.0
    %2317 = vmatpush2.msra.mxu0 0.0
    %2318 = vmatprep.subr.mxu0 0.0
    %2319 = vmatpush2.msra.mxu0 0.0
    %2320 = vmatprep.mubr.f32.mxu0 0.0
    %2321 = vmatmul.mubr.f32.gmra.mxu0 %v2161
    %v2322 = vpop.f32.mrf.mxu0
    %v2323 = vadd.f32 %v2157, %v2322
    %v2324 = vpop.f32.mrf.mxu0
    %2325 = vmatprep.mubr.f32.mxu0 0.0
    %2326 = vmatmul.mubr.f32.gmra.mxu0 %v2164
    %v2327 = vpop.f32.mrf.mxu0
    %v2328 = vadd.f32 %v2157, %v2327
    %v2329 = vpop.f32.mrf.mxu0
    %2330 = vmatprep.mubr.f32.mxu0 0.0
    %2331 = vmatmul.mubr.f32.gmra.mxu0 %v2167
    %v2332 = vpop.f32.mrf.mxu0
    %v2333 = vadd.f32 %v2157, %v2332
    %v2334 = vpop.f32.mrf.mxu0
    %2335 = vmatprep.mubr.f32.mxu0 0.0
    %2336 = vmatmul.mubr.f32.gmra.mxu0 %v2170
    %v2337 = vpop.f32.mrf.mxu0
    %v2338 = vadd.f32 %v2157, %v2337
    %v2339 = vpop.f32.mrf.mxu0
    %2340 = vmatprep.mubr.f32.mxu0 0.0
    %2341 = vmatmul.mubr.f32.gmra.mxu0 %v2173
    %v2342 = vpop.f32.mrf.mxu0
    %v2343 = vadd.f32 %v2157, %v2342
    %v2344 = vpop.f32.mrf.mxu0
    %2345 = vmatprep.mubr.f32.mxu0 0.0
    %2346 = vmatmul.mubr.f32.gmra.mxu0 %v2176
    %v2347 = vpop.f32.mrf.mxu0
    %v2348 = vadd.f32 %v2157, %v2347
    %v2349 = vpop.f32.mrf.mxu0
    %2350 = vmatprep.mubr.f32.mxu0 0.0
    %2351 = vmatmul.mubr.f32.gmra.mxu0 %v2179
    %v2352 = vpop.f32.mrf.mxu0
    %v2353 = vadd.f32 %v2157, %v2352
    %v2354 = vpop.f32.mrf.mxu0
    %2355 = vmatprep.mubr.f32.mxu0 0.0
    %2356 = vmatmul.mubr.f32.gmra.mxu0 %v2182
    %v2357 = vpop.f32.mrf.mxu0
    %v2358 = vadd.f32 %v2157, %v2357
    %v2359 = vpop.f32.mrf.mxu0
    %2360 = vmatprep.mubr.f32.mxu0 0.0
    %2361 = vmatmul.mubr.f32.gmra.mxu0 %v2185
    %v2362 = vpop.f32.mrf.mxu0
    %v2363 = vadd.f32 %v2157, %v2362
    %v2364 = vpop.f32.mrf.mxu0
    %2365 = vmatprep.mubr.f32.mxu0 0.0
    %2366 = vmatmul.mubr.f32.gmra.mxu0 %v2188
    %v2367 = vpop.f32.mrf.mxu0
    %v2368 = vadd.f32 %v2157, %v2367
    %v2369 = vpop.f32.mrf.mxu0
    %2370 = vmatprep.mubr.f32.mxu0 0.0
    %2371 = vmatmul.mubr.f32.gmra.mxu0 %v2191
    %v2372 = vpop.f32.mrf.mxu0
    %v2373 = vadd.f32 %v2157, %v2372
    %v2374 = vpop.f32.mrf.mxu0
    %2375 = vmatprep.mubr.f32.mxu0 0.0
    %2376 = vmatmul.mubr.f32.gmra.mxu0 %v2194
    %v2377 = vpop.f32.mrf.mxu0
    %v2378 = vadd.f32 %v2157, %v2377
    %v2379 = vpop.f32.mrf.mxu0
    %2380 = vmatprep.mubr.f32.mxu0 0.0
    %2381 = vmatmul.mubr.f32.gmra.mxu0 %v2197
    %v2382 = vpop.f32.mrf.mxu0
    %v2383 = vadd.f32 %v2157, %v2382
    %v2384 = vpop.f32.mrf.mxu0
    %2385 = vmatprep.mubr.f32.mxu0 0.0
    %2386 = vmatmul.mubr.f32.gmra.mxu0 %v2200
    %v2387 = vpop.f32.mrf.mxu0
    %v2388 = vadd.f32 %v2157, %v2387
    %v2389 = vpop.f32.mrf.mxu0
    %2390 = vmatprep.mubr.f32.mxu0 0.0
    %2391 = vmatmul.mubr.f32.gmra.mxu0 %v2203
    %v2392 = vpop.f32.mrf.mxu0
    %v2393 = vadd.f32 %v2157, %v2392
    %v2394 = vpop.f32.mrf.mxu0
    %2395 = vmatprep.mubr.f32.mxu0 0.0
    %2396 = vmatmul.mubr.f32.gmra.mxu0 %v2206
    %v2397 = vpop.f32.mrf.mxu0
    %v2398 = vadd.f32 %v2157, %v2397
    %v2399 = vpop.f32.mrf.mxu0
    %2400 = vmatprep.mubr.f32.mxu0 0.0
    %2401 = vmatmul.mubr.f32.gmra.mxu0 %v2209
    %v2402 = vpop.f32.mrf.mxu0
    %v2403 = vadd.f32 %v2157, %v2402
    %v2404 = vpop.f32.mrf.mxu0
    %2405 = vmatprep.mubr.f32.mxu0 0.0
    %2406 = vmatmul.mubr.f32.gmra.mxu0 %v2212
    %v2407 = vpop.f32.mrf.mxu0
    %v2408 = vadd.f32 %v2157, %v2407
    %v2409 = vpop.f32.mrf.mxu0
    %2410 = vmatprep.mubr.f32.mxu0 0.0
    %2411 = vmatmul.mubr.f32.gmra.mxu0 %v2215
    %v2412 = vpop.f32.mrf.mxu0
    %v2413 = vadd.f32 %v2157, %v2412
    %v2414 = vpop.f32.mrf.mxu0
    %2415 = vmatprep.mubr.f32.mxu0 0.0
    %2416 = vmatmul.mubr.f32.gmra.mxu0 %v2218
    %v2417 = vpop.f32.mrf.mxu0
    %v2418 = vadd.f32 %v2157, %v2417
    %v2419 = vpop.f32.mrf.mxu0
    %2420 = vmatprep.mubr.f32.mxu0 0.0
    %2421 = vmatmul.mubr.f32.gmra.mxu0 %v2221
    %v2422 = vpop.f32.mrf.mxu0
    %v2423 = vadd.f32 %v2157, %v2422
    %v2424 = vpop.f32.mrf.mxu0
    %2425 = vmatprep.mubr.f32.mxu0 0.0
    %2426 = vmatmul.mubr.f32.gmra.mxu0 %v2224
    %v2427 = vpop.f32.mrf.mxu0
    %v2428 = vadd.f32 %v2157, %v2427
    %v2429 = vpop.f32.mrf.mxu0
    %2430 = vmatprep.mubr.f32.mxu0 0.0
    %2431 = vmatmul.mubr.f32.gmra.mxu0 %v2227
    %v2432 = vpop.f32.mrf.mxu0
    %v2433 = vadd.f32 %v2157, %v2432
    %v2434 = vpop.f32.mrf.mxu0
    %2435 = vmatprep.mubr.f32.mxu0 0.0
    %2436 = vmatmul.mubr.f32.gmra.mxu0 %v2230
    %v2437 = vpop.f32.mrf.mxu0
    %v2438 = vadd.f32 %v2157, %v2437
    %v2439 = vpop.f32.mrf.mxu0
    %2440 = vmatprep.mubr.f32.mxu0 0.0
    %2441 = vmatmul.mubr.f32.gmra.mxu0 %v2233
    %v2442 = vpop.f32.mrf.mxu0
    %v2443 = vadd.f32 %v2157, %v2442
    %v2444 = vpop.f32.mrf.mxu0
    %2445 = vmatprep.mubr.f32.mxu0 0.0
    %2446 = vmatmul.mubr.f32.gmra.mxu0 %v2236
    %v2447 = vpop.f32.mrf.mxu0
    %v2448 = vadd.f32 %v2157, %v2447
    %v2449 = vpop.f32.mrf.mxu0
    %2450 = vmatprep.mubr.f32.mxu0 0.0
    %2451 = vmatmul.mubr.f32.gmra.mxu0 %v2239
    %v2452 = vpop.f32.mrf.mxu0
    %v2453 = vadd.f32 %v2157, %v2452
    %v2454 = vpop.f32.mrf.mxu0
    %2455 = vmatprep.mubr.f32.mxu0 0.0
    %2456 = vmatmul.mubr.f32.gmra.mxu0 %v2242
    %v2457 = vpop.f32.mrf.mxu0
    %v2458 = vadd.f32 %v2157, %v2457
    %v2459 = vpop.f32.mrf.mxu0
    %2460 = vmatprep.mubr.f32.mxu0 0.0
    %2461 = vmatmul.mubr.f32.gmra.mxu0 %v2245
    %v2462 = vpop.f32.mrf.mxu0
    %v2463 = vadd.f32 %v2157, %v2462
    %v2464 = vpop.f32.mrf.mxu0
    %2465 = vmatprep.mubr.f32.mxu0 0.0
    %2466 = vmatmul.mubr.f32.gmra.mxu0 %v2248
    %v2467 = vpop.f32.mrf.mxu0
    %v2468 = vadd.f32 %v2157, %v2467
    %v2469 = vpop.f32.mrf.mxu0
    %2470 = vmatprep.mubr.f32.mxu0 0.0
    %2471 = vmatmul.mubr.f32.gmra.mxu0 %v2251
    %v2472 = vpop.f32.mrf.mxu0
    %v2473 = vadd.f32 %v2157, %v2472
    %v2474 = vpop.f32.mrf.mxu0
    %2475 = vmatprep.mubr.f32.mxu0 0.0
    %2476 = vmatmul.mubr.f32.gmra.mxu0 %v2254
    %v2477 = vpop.f32.mrf.mxu0
    %v2478 = vadd.f32 %v2157, %v2477
    %v2479 = vpop.f32.mrf.mxu0
    %2480 = vdwg.mxu0
    %v2481 = vmax.f32 %v2323, 0.0
    %v2482 = vmax.f32 %v2328, 0.0
    %v2483 = vmax.f32 %v2333, 0.0
    %v2484 = vmax.f32 %v2338, 0.0
    %v2485 = vmax.f32 %v2343, 0.0
    %v2486 = vmax.f32 %v2348, 0.0
    %v2487 = vmax.f32 %v2353, 0.0
    %v2488 = vmax.f32 %v2358, 0.0
    %v2489 = vmax.f32 %v2363, 0.0
    %v2490 = vmax.f32 %v2368, 0.0
    %v2491 = vmax.f32 %v2373, 0.0
    %v2492 = vmax.f32 %v2378, 0.0
    %v2493 = vmax.f32 %v2383, 0.0
    %v2494 = vmax.f32 %v2388, 0.0
    %v2495 = vmax.f32 %v2393, 0.0
    %v2496 = vmax.f32 %v2398, 0.0
    %v2497 = vmax.f32 %v2403, 0.0
    %v2498 = vmax.f32 %v2408, 0.0
    %v2499 = vmax.f32 %v2413, 0.0
    %v2500 = vmax.f32 %v2418, 0.0
    %v2501 = vmax.f32 %v2423, 0.0
    %v2502 = vmax.f32 %v2428, 0.0
    %v2503 = vmax.f32 %v2433, 0.0
    %v2504 = vmax.f32 %v2438, 0.0
    %v2505 = vmax.f32 %v2443, 0.0
    %v2506 = vmax.f32 %v2448, 0.0
    %v2507 = vmax.f32 %v2453, 0.0
    %v2508 = vmax.f32 %v2458, 0.0
    %v2509 = vmax.f32 %v2463, 0.0
    %v2510 = vmax.f32 %v2468, 0.0
    %v2511 = vmax.f32 %v2473, 0.0
    %v2512 = vmax.f32 %v2478, 0.0
    %v2513 = vld [vmem:[%s7] sm:$0xff]
    %v2514 = vld [vmem:[%s7 + $0x8] sm:$0xff]
    %v2515 = vld [vmem:[%s7 + $0x10] sm:$0xff]
    %v2516 = vld [vmem:[%s7 + $0x18] sm:$0xff]
    %v2517 = vld [vmem:[%s7 + $0x20] sm:$0xff]
    %v2518 = vld [vmem:[%s7 + $0x28] sm:$0xff]
    %v2519 = vld [vmem:[%s7 + $0x30] sm:$0xff]
    %v2520 = vld [vmem:[%s7 + $0x38] sm:$0xff]
    %v2521 = vld [vmem:[%s8] sm:$0x1]
    %v2523 = vlaneseq
    %v2524 = vshrl.u32 %v2523, 7
    %v2525 = vsub.s32 0, %v2524
    %v2526 = vrot.slane %v2521, %v2525
    %v2529 = vsel %vm2159, %v2481, 0
    %v2532 = vsel %vm2159, %v2482, 0
    %v2535 = vsel %vm2159, %v2483, 0
    %v2538 = vsel %vm2159, %v2484, 0
    %v2541 = vsel %vm2159, %v2485, 0
    %v2544 = vsel %vm2159, %v2486, 0
    %v2547 = vsel %vm2159, %v2487, 0
    %v2550 = vsel %vm2159, %v2488, 0
    %v2553 = vsel %vm2159, %v2489, 0
    %v2556 = vsel %vm2159, %v2490, 0
    %v2559 = vsel %vm2159, %v2491, 0
    %v2562 = vsel %vm2159, %v2492, 0
    %v2565 = vsel %vm2159, %v2493, 0
    %v2568 = vsel %vm2159, %v2494, 0
    %v2571 = vsel %vm2159, %v2495, 0
    %v2574 = vsel %vm2159, %v2496, 0
    %v2577 = vsel %vm2159, %v2497, 0
    %v2580 = vsel %vm2159, %v2498, 0
    %v2583 = vsel %vm2159, %v2499, 0
    %v2586 = vsel %vm2159, %v2500, 0
    %v2589 = vsel %vm2159, %v2501, 0
    %v2592 = vsel %vm2159, %v2502, 0
    %v2595 = vsel %vm2159, %v2503, 0
    %v2598 = vsel %vm2159, %v2504, 0
    %v2601 = vsel %vm2159, %v2505, 0
    %v2604 = vsel %vm2159, %v2506, 0
    %v2607 = vsel %vm2159, %v2507, 0
    %v2610 = vsel %vm2159, %v2508, 0
    %v2613 = vsel %vm2159, %v2509, 0
    %v2616 = vsel %vm2159, %v2510, 0
    %v2619 = vsel %vm2159, %v2511, 0
    %v2622 = vsel %vm2159, %v2512, 0
    %2624 = vmatprep.subr.mxu0 0.0
    %2625 = vmatpush1.msra.mxu0 0.0
    %2626 = vmatprep.subr.mxu0 0.0
    %2627 = vmatpush1.msra.mxu0 0.0
    %2628 = vmatprep.subr.mxu0 0.0
    %2629 = vmatpush1.msra.mxu0 0.0
    %2630 = vmatprep.subr.mxu0 0.0
    %2631 = vmatpush1.msra.mxu0 0.0
    %2632 = vmatprep.subr.mxu0 0.0
    %2633 = vmatpush1.msra.mxu0 0.0
    %2634 = vmatprep.subr.mxu0 0.0
    %2635 = vmatpush1.msra.mxu0 0.0
    %2636 = vmatprep.subr.mxu0 0.0
    %2637 = vmatpush1.msra.mxu0 0.0
    %2638 = vmatprep.subr.mxu0 0.0
    %2639 = vmatpush1.msra.mxu0 0.0
    %2640 = vmatprep.subr.mxu0 0.0
    %2641 = vmatpush1.msra.mxu0 %v2520
    %2642 = vmatprep.subr.mxu0 0.0
    %2643 = vmatpush1.msra.mxu0 %v2519
    %2644 = vmatprep.subr.mxu0 0.0
    %2645 = vmatpush1.msra.mxu0 %v2518
    %2646 = vmatprep.subr.mxu0 0.0
    %2647 = vmatpush1.msra.mxu0 %v2517
    %2648 = vmatprep.subr.mxu0 0.0
    %2649 = vmatpush1.msra.mxu0 %v2516
    %2650 = vmatprep.subr.mxu0 0.0
    %2651 = vmatpush1.msra.mxu0 %v2515
    %2652 = vmatprep.subr.mxu0 0.0
    %2653 = vmatpush1.msra.mxu0 %v2514
    %2654 = vmatprep.subr.mxu0 0.0
    %2655 = vmatpush1.msra.mxu0 %v2513
    %2656 = vmatprep.subr.mxu0 0.0
    %2657 = vmatpush2.msra.mxu0 0.0
    %2658 = vmatprep.subr.mxu0 0.0
    %2659 = vmatpush2.msra.mxu0 0.0
    %2660 = vmatprep.subr.mxu0 0.0
    %2661 = vmatpush2.msra.mxu0 0.0
    %2662 = vmatprep.subr.mxu0 0.0
    %2663 = vmatpush2.msra.mxu0 0.0
    %2664 = vmatprep.subr.mxu0 0.0
    %2665 = vmatpush2.msra.mxu0 0.0
    %2666 = vmatprep.subr.mxu0 0.0
    %2667 = vmatpush2.msra.mxu0 0.0
    %2668 = vmatprep.subr.mxu0 0.0
    %2669 = vmatpush2.msra.mxu0 0.0
    %2670 = vmatprep.subr.mxu0 0.0
    %2671 = vmatpush2.msra.mxu0 0.0
    %2672 = vmatprep.subr.mxu0 0.0
    %2673 = vmatpush2.msra.mxu0 0.0
    %2674 = vmatprep.subr.mxu0 0.0
    %2675 = vmatpush2.msra.mxu0 0.0
    %2676 = vmatprep.subr.mxu0 0.0
    %2677 = vmatpush2.msra.mxu0 0.0
    %2678 = vmatprep.subr.mxu0 0.0
    %2679 = vmatpush2.msra.mxu0 0.0
    %2680 = vmatprep.subr.mxu0 0.0
    %2681 = vmatpush2.msra.mxu0 0.0
    %2682 = vmatprep.subr.mxu0 0.0
    %2683 = vmatpush2.msra.mxu0 0.0
    %2684 = vmatprep.subr.mxu0 0.0
    %2685 = vmatpush2.msra.mxu0 0.0
    %2686 = vmatprep.subr.mxu0 0.0
    %2687 = vmatpush2.msra.mxu0 0.0
    %2688 = vmatprep.mubr.f32.mxu0 0.0
    %2689 = vmatmul.mubr.f32.gmra.mxu0 %v2529
    %v2690 = vpop.f32.mrf.mxu0
    %v2691 = vadd.f32 %v2526, %v2690
    %v2692 = vpop.f32.mrf.mxu0
    %2693 = vmatprep.mubr.f32.mxu0 0.0
    %2694 = vmatmul.mubr.f32.gmra.mxu0 %v2532
    %v2695 = vpop.f32.mrf.mxu0
    %v2696 = vadd.f32 %v2526, %v2695
    %v2697 = vpop.f32.mrf.mxu0
    %2698 = vmatprep.mubr.f32.mxu0 0.0
    %2699 = vmatmul.mubr.f32.gmra.mxu0 %v2535
    %v2700 = vpop.f32.mrf.mxu0
    %v2701 = vadd.f32 %v2526, %v2700
    %v2702 = vpop.f32.mrf.mxu0
    %2703 = vmatprep.mubr.f32.mxu0 0.0
    %2704 = vmatmul.mubr.f32.gmra.mxu0 %v2538
    %v2705 = vpop.f32.mrf.mxu0
    %v2706 = vadd.f32 %v2526, %v2705
    %v2707 = vpop.f32.mrf.mxu0
    %2708 = vmatprep.mubr.f32.mxu0 0.0
    %2709 = vmatmul.mubr.f32.gmra.mxu0 %v2541
    %v2710 = vpop.f32.mrf.mxu0
    %v2711 = vadd.f32 %v2526, %v2710
    %v2712 = vpop.f32.mrf.mxu0
    %2713 = vmatprep.mubr.f32.mxu0 0.0
    %2714 = vmatmul.mubr.f32.gmra.mxu0 %v2544
    %v2715 = vpop.f32.mrf.mxu0
    %v2716 = vadd.f32 %v2526, %v2715
    %v2717 = vpop.f32.mrf.mxu0
    %2718 = vmatprep.mubr.f32.mxu0 0.0
    %2719 = vmatmul.mubr.f32.gmra.mxu0 %v2547
    %v2720 = vpop.f32.mrf.mxu0
    %v2721 = vadd.f32 %v2526, %v2720
    %v2722 = vpop.f32.mrf.mxu0
    %2723 = vmatprep.mubr.f32.mxu0 0.0
    %2724 = vmatmul.mubr.f32.gmra.mxu0 %v2550
    %v2725 = vpop.f32.mrf.mxu0
    %v2726 = vadd.f32 %v2526, %v2725
    %v2727 = vpop.f32.mrf.mxu0
    %2728 = vmatprep.mubr.f32.mxu0 0.0
    %2729 = vmatmul.mubr.f32.gmra.mxu0 %v2553
    %v2730 = vpop.f32.mrf.mxu0
    %v2731 = vadd.f32 %v2526, %v2730
    %v2732 = vpop.f32.mrf.mxu0
    %2733 = vmatprep.mubr.f32.mxu0 0.0
    %2734 = vmatmul.mubr.f32.gmra.mxu0 %v2556
    %v2735 = vpop.f32.mrf.mxu0
    %v2736 = vadd.f32 %v2526, %v2735
    %v2737 = vpop.f32.mrf.mxu0
    %2738 = vmatprep.mubr.f32.mxu0 0.0
    %2739 = vmatmul.mubr.f32.gmra.mxu0 %v2559
    %v2740 = vpop.f32.mrf.mxu0
    %v2741 = vadd.f32 %v2526, %v2740
    %v2742 = vpop.f32.mrf.mxu0
    %2743 = vmatprep.mubr.f32.mxu0 0.0
    %2744 = vmatmul.mubr.f32.gmra.mxu0 %v2562
    %v2745 = vpop.f32.mrf.mxu0
    %v2746 = vadd.f32 %v2526, %v2745
    %v2747 = vpop.f32.mrf.mxu0
    %2748 = vmatprep.mubr.f32.mxu0 0.0
    %2749 = vmatmul.mubr.f32.gmra.mxu0 %v2565
    %v2750 = vpop.f32.mrf.mxu0
    %v2751 = vadd.f32 %v2526, %v2750
    %v2752 = vpop.f32.mrf.mxu0
    %2753 = vmatprep.mubr.f32.mxu0 0.0
    %2754 = vmatmul.mubr.f32.gmra.mxu0 %v2568
    %v2755 = vpop.f32.mrf.mxu0
    %v2756 = vadd.f32 %v2526, %v2755
    %v2757 = vpop.f32.mrf.mxu0
    %2758 = vmatprep.mubr.f32.mxu0 0.0
    %2759 = vmatmul.mubr.f32.gmra.mxu0 %v2571
    %v2760 = vpop.f32.mrf.mxu0
    %v2761 = vadd.f32 %v2526, %v2760
    %v2762 = vpop.f32.mrf.mxu0
    %2763 = vmatprep.mubr.f32.mxu0 0.0
    %2764 = vmatmul.mubr.f32.gmra.mxu0 %v2574
    %v2765 = vpop.f32.mrf.mxu0
    %v2766 = vadd.f32 %v2526, %v2765
    %v2767 = vpop.f32.mrf.mxu0
    %2768 = vmatprep.mubr.f32.mxu0 0.0
    %2769 = vmatmul.mubr.f32.gmra.mxu0 %v2577
    %v2770 = vpop.f32.mrf.mxu0
    %v2771 = vadd.f32 %v2526, %v2770
    %v2772 = vpop.f32.mrf.mxu0
    %2773 = vmatprep.mubr.f32.mxu0 0.0
    %2774 = vmatmul.mubr.f32.gmra.mxu0 %v2580
    %v2775 = vpop.f32.mrf.mxu0
    %v2776 = vadd.f32 %v2526, %v2775
    %v2777 = vpop.f32.mrf.mxu0
    %2778 = vmatprep.mubr.f32.mxu0 0.0
    %2779 = vmatmul.mubr.f32.gmra.mxu0 %v2583
    %v2780 = vpop.f32.mrf.mxu0
    %v2781 = vadd.f32 %v2526, %v2780
    %v2782 = vpop.f32.mrf.mxu0
    %2783 = vmatprep.mubr.f32.mxu0 0.0
    %2784 = vmatmul.mubr.f32.gmra.mxu0 %v2586
    %v2785 = vpop.f32.mrf.mxu0
    %v2786 = vadd.f32 %v2526, %v2785
    %v2787 = vpop.f32.mrf.mxu0
    %2788 = vmatprep.mubr.f32.mxu0 0.0
    %2789 = vmatmul.mubr.f32.gmra.mxu0 %v2589
    %v2790 = vpop.f32.mrf.mxu0
    %v2791 = vadd.f32 %v2526, %v2790
    %v2792 = vpop.f32.mrf.mxu0
    %2793 = vmatprep.mubr.f32.mxu0 0.0
    %2794 = vmatmul.mubr.f32.gmra.mxu0 %v2592
    %v2795 = vpop.f32.mrf.mxu0
    %v2796 = vadd.f32 %v2526, %v2795
    %v2797 = vpop.f32.mrf.mxu0
    %2798 = vmatprep.mubr.f32.mxu0 0.0
    %2799 = vmatmul.mubr.f32.gmra.mxu0 %v2595
    %v2800 = vpop.f32.mrf.mxu0
    %v2801 = vadd.f32 %v2526, %v2800
    %v2802 = vpop.f32.mrf.mxu0
    %2803 = vmatprep.mubr.f32.mxu0 0.0
    %2804 = vmatmul.mubr.f32.gmra.mxu0 %v2598
    %v2805 = vpop.f32.mrf.mxu0
    %v2806 = vadd.f32 %v2526, %v2805
    %v2807 = vpop.f32.mrf.mxu0
    %2808 = vmatprep.mubr.f32.mxu0 0.0
    %2809 = vmatmul.mubr.f32.gmra.mxu0 %v2601
    %v2810 = vpop.f32.mrf.mxu0
    %v2811 = vadd.f32 %v2526, %v2810
    %v2812 = vpop.f32.mrf.mxu0
    %2813 = vmatprep.mubr.f32.mxu0 0.0
    %2814 = vmatmul.mubr.f32.gmra.mxu0 %v2604
    %v2815 = vpop.f32.mrf.mxu0
    %v2816 = vadd.f32 %v2526, %v2815
    %v2817 = vpop.f32.mrf.mxu0
    %2818 = vmatprep.mubr.f32.mxu0 0.0
    %2819 = vmatmul.mubr.f32.gmra.mxu0 %v2607
    %v2820 = vpop.f32.mrf.mxu0
    %v2821 = vadd.f32 %v2526, %v2820
    %v2822 = vpop.f32.mrf.mxu0
    %2823 = vmatprep.mubr.f32.mxu0 0.0
    %2824 = vmatmul.mubr.f32.gmra.mxu0 %v2610
    %v2825 = vpop.f32.mrf.mxu0
    %v2826 = vadd.f32 %v2526, %v2825
    %v2827 = vpop.f32.mrf.mxu0
    %2828 = vmatprep.mubr.f32.mxu0 0.0
    %2829 = vmatmul.mubr.f32.gmra.mxu0 %v2613
    %v2830 = vpop.f32.mrf.mxu0
    %v2831 = vadd.f32 %v2526, %v2830
    %v2832 = vpop.f32.mrf.mxu0
    %2833 = vmatprep.mubr.f32.mxu0 0.0
    %2834 = vmatmul.mubr.f32.gmra.mxu0 %v2616
    %v2835 = vpop.f32.mrf.mxu0
    %v2836 = vadd.f32 %v2526, %v2835
    %v2837 = vpop.f32.mrf.mxu0
    %2838 = vmatprep.mubr.f32.mxu0 0.0
    %2839 = vmatmul.mubr.f32.gmra.mxu0 %v2619
    %v2840 = vpop.f32.mrf.mxu0
    %v2841 = vadd.f32 %v2526, %v2840
    %v2842 = vpop.f32.mrf.mxu0
    %2843 = vmatprep.mubr.f32.mxu0 0.0
    %2844 = vmatmul.mubr.f32.gmra.mxu0 %v2622
    %v2845 = vpop.f32.mrf.mxu0
    %v2846 = vadd.f32 %v2526, %v2845
    %v2847 = vpop.f32.mrf.mxu0
    %2848 = vdwg.mxu0
    %vm2849 = vcmask 261120
    %2850 = vst.msk [vmem:[%s9] sm:$0xff] %vm2849, %v2691
    %2851 = vst.msk [vmem:[%s9 + $0x8] sm:$0xff] %vm2849, %v2696
    %2852 = vst.msk [vmem:[%s9 + $0x10] sm:$0xff] %vm2849, %v2701
    %2853 = vst.msk [vmem:[%s9 + $0x18] sm:$0xff] %vm2849, %v2706
    %2854 = vst.msk [vmem:[%s9 + $0x20] sm:$0xff] %vm2849, %v2711
    %2855 = vst.msk [vmem:[%s9 + $0x28] sm:$0xff] %vm2849, %v2716
    %2856 = vst.msk [vmem:[%s9 + $0x30] sm:$0xff] %vm2849, %v2721
    %2857 = vst.msk [vmem:[%s9 + $0x38] sm:$0xff] %vm2849, %v2726
    %2858 = vst.msk [vmem:[%s9 + $0x40] sm:$0xff] %vm2849, %v2731
    %2859 = vst.msk [vmem:[%s9 + $0x48] sm:$0xff] %vm2849, %v2736
    %2860 = vst.msk [vmem:[%s9 + $0x50] sm:$0xff] %vm2849, %v2741
    %2861 = vst.msk [vmem:[%s9 + $0x58] sm:$0xff] %vm2849, %v2746
    %2862 = vst.msk [vmem:[%s9 + $0x60] sm:$0xff] %vm2849, %v2751
    %2863 = vst.msk [vmem:[%s9 + $0x68] sm:$0xff] %vm2849, %v2756
    %2864 = vst.msk [vmem:[%s9 + $0x70] sm:$0xff] %vm2849, %v2761
    %2865 = vst.msk [vmem:[%s9 + $0x78] sm:$0xff] %vm2849, %v2766
    %2866 = vst.msk [vmem:[%s9 + $0x80] sm:$0xff] %vm2849, %v2771
    %2867 = vst.msk [vmem:[%s9 + $0x88] sm:$0xff] %vm2849, %v2776
    %2868 = vst.msk [vmem:[%s9 + $0x90] sm:$0xff] %vm2849, %v2781
    %2869 = vst.msk [vmem:[%s9 + $0x98] sm:$0xff] %vm2849, %v2786
    %2870 = vst.msk [vmem:[%s9 + $0xa0] sm:$0xff] %vm2849, %v2791
    %2871 = vst.msk [vmem:[%s9 + $0xa8] sm:$0xff] %vm2849, %v2796
    %2872 = vst.msk [vmem:[%s9 + $0xb0] sm:$0xff] %vm2849, %v2801
    %2873 = vst.msk [vmem:[%s9 + $0xb8] sm:$0xff] %vm2849, %v2806
    %2874 = vst.msk [vmem:[%s9 + $0xc0] sm:$0xff] %vm2849, %v2811
    %2875 = vst.msk [vmem:[%s9 + $0xc8] sm:$0xff] %vm2849, %v2816
    %2876 = vst.msk [vmem:[%s9 + $0xd0] sm:$0xff] %vm2849, %v2821
    %2877 = vst.msk [vmem:[%s9 + $0xd8] sm:$0xff] %vm2849, %v2826
    %2878 = vst.msk [vmem:[%s9 + $0xe0] sm:$0xff] %vm2849, %v2831
    %2879 = vst.msk [vmem:[%s9 + $0xe8] sm:$0xff] %vm2849, %v2836
    %2880 = vst.msk [vmem:[%s9 + $0xf0] sm:$0xff] %vm2849, %v2841
    %2881 = vst.msk [vmem:[%s9 + $0xf8] sm:$0xff] %vm2849, %v2846
    // Predicated region
    $region46: #{tpu_custom_call.1} parent=1 // pred_check
      _
    $region47: #{tpu_custom_call.1} parent=1 // pred_check_branch
      %2883 = sbr.rel (0) target = $region49
    $region48: #{tpu_custom_call.1} parent=1 // pred_region
      _
    $region49: #{tpu_custom_call.1} parent=1 // pred_fallthru
      _
    // Predicated region
    $region50: #{tpu_custom_call.1} parent=1 // pred_check
      _
    $region51: #{tpu_custom_call.1} parent=1 // pred_check_branch
      %2885 = sbr.rel (0) target = $region53
    $region52: #{tpu_custom_call.1} parent=1 // pred_region
      _
    $region53: #{tpu_custom_call.1} parent=1 // pred_fallthru
      _
    %2886 = vsyncpa [#allocation3], 1
    %2887 = vsyncpa [#allocation5], 1

</llo_original>
